<compile_context>
chip_gen: v7x
topology: tpu7x:2x2x1
jax: 0.10.0
libtpu: 0.0.40
codegen_flags: <defaults>
</compile_context>

<pallas_src>
import jax
import jax.numpy as jnp
from jax.experimental import pallas as pl
from jax.experimental.pallas import tpu as pltpu


def _residual_conv3x3_kernel(x_ref, w_ref, b_ref, o_ref, xpad_ref, col_ref):
    """Per-image kernel: 3x3 SAME conv + bias + identity residual (NHWC).

    x_ref   : (1, H, W, Cin)   input tile (also reused as the residual branch)
    w_ref   : (9*Cin, Cout)    conv weights, rows ordered (dy, dx, cin)
    b_ref   : (1, Cout)        conv bias
    o_ref   : (1, H, W, Cout)  output tile
    xpad_ref: (H+2, W+2, Cin)  VMEM scratch: zero-padded image built in-kernel
    col_ref : (H, W, 9*Cin)    VMEM scratch: im2col patch matrix
    """
    H, W, C = x_ref.shape[1], x_ref.shape[2], x_ref.shape[3]
    Cout = o_ref.shape[3]

    x = x_ref[0]  # (H, W, C) — already in VMEM; no second DMA for the residual.

    # Build the zero-padded image in VMEM (no padded HBM copy in the wrapper).
    # Full re-zero every iteration keeps this correct under megacore sharding.
    xpad_ref[...] = jnp.zeros_like(xpad_ref)
    xpad_ref[pl.ds(1, H), pl.ds(1, W), :] = x.astype(xpad_ref.dtype)
    xpad = xpad_ref[...]

    # im2col: gather the 9 taps once into (H, W, 9*C); column blocks ordered
    # (dy, dx, cin) to match the weight-row order.
    for dy in range(3):
        for dx in range(3):
            t = dy * 3 + dx
            col_ref[:, :, pl.ds(t * C, C)] = xpad[dy:dy + H, dx:dx + W, :]

    patches = col_ref[...].reshape(H * W, 9 * C)

    # Single MXU matmul instead of nine tiny-K matmuls.
    # TODO(synk): for production shapes, cast patches/w to bfloat16 (keep f32
    # accumulation) — native MXU input format, halves VMEM bytes per tap.
    acc = jnp.dot(patches, w_ref[...], preferred_element_type=jnp.float32)

    # Fused bias + residual epilogue, single store.
    out = acc.reshape(H, W, Cout) + b_ref[...].astype(jnp.float32) + x.astype(jnp.float32)
    o_ref[0] = out.astype(o_ref.dtype)


def residual_forward(x_nchw, weight_oihw, bias):
    """Residual(block=Conv2d(C, C, 3, padding=1), bypass=None) forward.

    x_nchw      : (N, C, H, W)  float32
    weight_oihw : (Cout, Cin, 3, 3)
    bias        : (Cout,)
    returns     : (N, Cout, H, W)
    """
    N, C, H, W = x_nchw.shape
    Cout = weight_oihw.shape[0]

    # Layout glue only (no data duplication / padding in HBM).
    x_nhwc = jnp.transpose(x_nchw, (0, 2, 3, 1))                    # (N, H, W, C)
    # (Cout, Cin, 3, 3) -> (3, 3, Cin, Cout) -> (9*Cin, Cout); row order matches
    # the (dy, dx, cin) im2col column order used in the kernel.
    w_mat = jnp.transpose(weight_oihw, (2, 3, 1, 0)).reshape(9 * C, Cout)
    b2d = bias.reshape(1, Cout)

    # Explicit scoped-VMEM sizing: double-buffered in/out blocks + weights +
    # both scratches, with headroom, clamped to 64 MiB (v7x physical).
    in_blk = H * W * C * 4
    out_blk = H * W * Cout * 4
    w_bytes = 9 * C * Cout * 4
    scratch_bytes = (H + 2) * (W + 2) * C * 4 + H * W * 9 * C * 4
    est = 2 * (in_blk + out_blk + w_bytes) + scratch_bytes + (4 << 20)
    vmem_limit = int(min(64 << 20, max(8 << 20, 2 * est)))

    # TODO(synk): at production RefineNet shapes (C~256, H,W~128+) add an H-row
    # grid axis (row tiles with a 1-row halo) so blocks fit v7x's 64 MiB VMEM
    # and both TensorCores get parallel work; whole-image blocks are fine at
    # the small test shape.
    out_nhwc = pl.pallas_call(
        _residual_conv3x3_kernel,
        out_shape=jax.ShapeDtypeStruct((N, H, W, Cout), x_nchw.dtype),
        grid_spec=pltpu.PrefetchScalarGridSpec(
            num_scalar_prefetch=0,
            grid=(N,),
            in_specs=[
                pl.BlockSpec((1, H, W, C), lambda n: (n, 0, 0, 0)),
                pl.BlockSpec((9 * C, Cout), lambda n: (0, 0)),
                pl.BlockSpec((1, Cout), lambda n: (0, 0)),
            ],
            out_specs=pl.BlockSpec((1, H, W, Cout), lambda n: (n, 0, 0, 0)),
            scratch_shapes=[
                pltpu.VMEM((H + 2, W + 2, C), jnp.float32),
                pltpu.VMEM((H, W, 9 * C), jnp.float32),
            ],
        ),
        compiler_params=pltpu.CompilerParams(
            dimension_semantics=("parallel",),
            vmem_limit_bytes=vmem_limit,
        ),
    )(x_nhwc, w_mat, b2d)

    return jnp.transpose(out_nhwc, (0, 3, 1, 2))                    # back to NCHW


def _reference(x_nchw, weight_oihw, bias):
    """Plain-JAX reference: conv3x3(pad=1) + bias + x."""
    conv = jax.lax.conv_general_dilated(
        x_nchw, weight_oihw,
        window_strides=(1, 1), padding="SAME",
        dimension_numbers=("NCHW", "OIHW", "NCHW"))
    return conv + bias.reshape(1, -1, 1, 1) + x_nchw


if __name__ == "__main__":
    key = jax.random.PRNGKey(0)
    k_x, k_w, k_b = jax.random.split(key, 3)

    N, C, H, W = 2, 4, 16, 16
    x = jax.random.normal(k_x, (N, C, H, W), dtype=jnp.float32)
    weight = jax.random.normal(k_w, (C, C, 3, 3), dtype=jnp.float32) * 0.1
    bias = jax.random.normal(k_b, (C,), dtype=jnp.float32) * 0.1

    out = jax.block_until_ready(residual_forward(x, weight, bias))

    ref = _reference(x, weight, bias)
    assert out.shape == (N, C, H, W)
    assert jnp.allclose(out, ref, atol=1e-3, rtol=1e-3), "mismatch vs reference"

    print("KERNEL_OK")
</pallas_src>

<mosaic_0001>
module attributes {stable_mosaic.version = 11 : i64} {
  func.func @_residual_conv3x3_kernel(%arg0: i32, %arg1: memref<1x16x16x4xf32, #tpu.memory_space<vmem>>, %arg2: memref<36x4xf32, #tpu.memory_space<vmem>>, %arg3: memref<1x4xf32, #tpu.memory_space<vmem>>, %arg4: memref<1x16x16x4xf32, #tpu.memory_space<vmem>>, %arg5: memref<18x18x4xf32, #tpu.memory_space<vmem>>, %arg6: memref<16x16x36xf32, #tpu.memory_space<vmem>>) attributes {dimension_semantics = [#tpu.dimension_semantics<parallel>], iteration_bounds = array<i64: 2>, scalar_prefetch = 0 : i64, scratch_operands = 2 : i64, tpu.core_type = #tpu.core_type<tc>, window_params = [{transform_indices = @transform_0, window_bounds = array<i64: 1, 16, 16, 4>}, {pipeline_mode = #tpu.pipeline_mode<synchronous>, transform_indices = @transform_1, window_bounds = array<i64: 36, 4>}, {pipeline_mode = #tpu.pipeline_mode<synchronous>, transform_indices = @transform_2, window_bounds = array<i64: 1, 4>}, {transform_indices = @transform_3, window_bounds = array<i64: 1, 16, 16, 4>}]} {
    %c0 = arith.constant 0 : index
    %c0_0 = arith.constant 0 : index
    %c0_1 = arith.constant 0 : index
    %c0_2 = arith.constant 0 : index
    %0 = vector.load %arg1[%c0, %c0_0, %c0_1, %c0_2] : memref<1x16x16x4xf32, #tpu.memory_space<vmem>>, vector<1x16x16x4xf32>
    %1 = vector.shape_cast %0 : vector<1x16x16x4xf32> to vector<16x16x4xf32>
    %cst = arith.constant 0.000000e+00 : f32
    %2 = vector.broadcast %cst : f32 to vector<18x18x4xf32>
    %c0_3 = arith.constant 0 : index
    %c0_4 = arith.constant 0 : index
    %c0_5 = arith.constant 0 : index
    %3 = vector.load %arg5[%c0_3, %c0_4, %c0_5] : memref<18x18x4xf32, #tpu.memory_space<vmem>>, vector<18x18x4xf32>
    tpu.vector_store %arg5[%c0_3, %c0_4, %c0_5], %2 {strides = array<i32>} : memref<18x18x4xf32, #tpu.memory_space<vmem>>, vector<18x18x4xf32>,
    %c1 = arith.constant 1 : index
    %c1_6 = arith.constant 1 : index
    %c0_7 = arith.constant 0 : index
    %4 = vector.load %arg5[%c1, %c1_6, %c0_7] : memref<18x18x4xf32, #tpu.memory_space<vmem>>, vector<16x16x4xf32>
    tpu.vector_store %arg5[%c1, %c1_6, %c0_7], %1 {strides = array<i32>} : memref<18x18x4xf32, #tpu.memory_space<vmem>>, vector<16x16x4xf32>,
    %c0_8 = arith.constant 0 : index
    %c0_9 = arith.constant 0 : index
    %c0_10 = arith.constant 0 : index
    %5 = vector.load %arg5[%c0_8, %c0_9, %c0_10] : memref<18x18x4xf32, #tpu.memory_space<vmem>>, vector<18x18x4xf32>
    %6 = vector.extract_strided_slice %5 {offsets = [0, 0, 0], sizes = [16, 16, 4], strides = [1, 1, 1]} : vector<18x18x4xf32> to vector<16x16x4xf32>
    %c0_11 = arith.constant 0 : index
    %c0_12 = arith.constant 0 : index
    %c0_13 = arith.constant 0 : index
    %7 = vector.load %arg6[%c0_11, %c0_12, %c0_13] : memref<16x16x36xf32, #tpu.memory_space<vmem>>, vector<16x16x4xf32>
    tpu.vector_store %arg6[%c0_11, %c0_12, %c0_13], %6 {strides = array<i32>} : memref<16x16x36xf32, #tpu.memory_space<vmem>>, vector<16x16x4xf32>,
    %8 = vector.extract_strided_slice %5 {offsets = [0, 1, 0], sizes = [16, 16, 4], strides = [1, 1, 1]} : vector<18x18x4xf32> to vector<16x16x4xf32>
    %c0_14 = arith.constant 0 : index
    %c0_15 = arith.constant 0 : index
    %c4 = arith.constant 4 : index
    %9 = vector.load %arg6[%c0_14, %c0_15, %c4] : memref<16x16x36xf32, #tpu.memory_space<vmem>>, vector<16x16x4xf32>
    tpu.vector_store %arg6[%c0_14, %c0_15, %c4], %8 {strides = array<i32>} : memref<16x16x36xf32, #tpu.memory_space<vmem>>, vector<16x16x4xf32>,
    %10 = vector.extract_strided_slice %5 {offsets = [0, 2, 0], sizes = [16, 16, 4], strides = [1, 1, 1]} : vector<18x18x4xf32> to vector<16x16x4xf32>
    %c0_16 = arith.constant 0 : index
    %c0_17 = arith.constant 0 : index
    %c8 = arith.constant 8 : index
    %11 = vector.load %arg6[%c0_16, %c0_17, %c8] : memref<16x16x36xf32, #tpu.memory_space<vmem>>, vector<16x16x4xf32>
    tpu.vector_store %arg6[%c0_16, %c0_17, %c8], %10 {strides = array<i32>} : memref<16x16x36xf32, #tpu.memory_space<vmem>>, vector<16x16x4xf32>,
    %12 = vector.extract_strided_slice %5 {offsets = [1, 0, 0], sizes = [16, 16, 4], strides = [1, 1, 1]} : vector<18x18x4xf32> to vector<16x16x4xf32>
    %c0_18 = arith.constant 0 : index
    %c0_19 = arith.constant 0 : index
    %c12 = arith.constant 12 : index
    %13 = vector.load %arg6[%c0_18, %c0_19, %c12] : memref<16x16x36xf32, #tpu.memory_space<vmem>>, vector<16x16x4xf32>
    tpu.vector_store %arg6[%c0_18, %c0_19, %c12], %12 {strides = array<i32>} : memref<16x16x36xf32, #tpu.memory_space<vmem>>, vector<16x16x4xf32>,
    %14 = vector.extract_strided_slice %5 {offsets = [1, 1, 0], sizes = [16, 16, 4], strides = [1, 1, 1]} : vector<18x18x4xf32> to vector<16x16x4xf32>
    %c0_20 = arith.constant 0 : index
    %c0_21 = arith.constant 0 : index
    %c16 = arith.constant 16 : index
    %15 = vector.load %arg6[%c0_20, %c0_21, %c16] : memref<16x16x36xf32, #tpu.memory_space<vmem>>, vector<16x16x4xf32>
    tpu.vector_store %arg6[%c0_20, %c0_21, %c16], %14 {strides = array<i32>} : memref<16x16x36xf32, #tpu.memory_space<vmem>>, vector<16x16x4xf32>,
    %16 = vector.extract_strided_slice %5 {offsets = [1, 2, 0], sizes = [16, 16, 4], strides = [1, 1, 1]} : vector<18x18x4xf32> to vector<16x16x4xf32>
    %c0_22 = arith.constant 0 : index
    %c0_23 = arith.constant 0 : index
    %c20 = arith.constant 20 : index
    %17 = vector.load %arg6[%c0_22, %c0_23, %c20] : memref<16x16x36xf32, #tpu.memory_space<vmem>>, vector<16x16x4xf32>
    tpu.vector_store %arg6[%c0_22, %c0_23, %c20], %16 {strides = array<i32>} : memref<16x16x36xf32, #tpu.memory_space<vmem>>, vector<16x16x4xf32>,
    %18 = vector.extract_strided_slice %5 {offsets = [2, 0, 0], sizes = [16, 16, 4], strides = [1, 1, 1]} : vector<18x18x4xf32> to vector<16x16x4xf32>
    %c0_24 = arith.constant 0 : index
    %c0_25 = arith.constant 0 : index
    %c24 = arith.constant 24 : index
    %19 = vector.load %arg6[%c0_24, %c0_25, %c24] : memref<16x16x36xf32, #tpu.memory_space<vmem>>, vector<16x16x4xf32>
    tpu.vector_store %arg6[%c0_24, %c0_25, %c24], %18 {strides = array<i32>} : memref<16x16x36xf32, #tpu.memory_space<vmem>>, vector<16x16x4xf32>,
    %20 = vector.extract_strided_slice %5 {offsets = [2, 1, 0], sizes = [16, 16, 4], strides = [1, 1, 1]} : vector<18x18x4xf32> to vector<16x16x4xf32>
    %c0_26 = arith.constant 0 : index
    %c0_27 = arith.constant 0 : index
    %c28 = arith.constant 28 : index
    %21 = vector.load %arg6[%c0_26, %c0_27, %c28] : memref<16x16x36xf32, #tpu.memory_space<vmem>>, vector<16x16x4xf32>
    tpu.vector_store %arg6[%c0_26, %c0_27, %c28], %20 {strides = array<i32>} : memref<16x16x36xf32, #tpu.memory_space<vmem>>, vector<16x16x4xf32>,
    %22 = vector.extract_strided_slice %5 {offsets = [2, 2, 0], sizes = [16, 16, 4], strides = [1, 1, 1]} : vector<18x18x4xf32> to vector<16x16x4xf32>
    %c0_28 = arith.constant 0 : index
    %c0_29 = arith.constant 0 : index
    %c32 = arith.constant 32 : index
    %23 = vector.load %arg6[%c0_28, %c0_29, %c32] : memref<16x16x36xf32, #tpu.memory_space<vmem>>, vector<16x16x4xf32>
    tpu.vector_store %arg6[%c0_28, %c0_29, %c32], %22 {strides = array<i32>} : memref<16x16x36xf32, #tpu.memory_space<vmem>>, vector<16x16x4xf32>,
    %c0_30 = arith.constant 0 : index
    %c0_31 = arith.constant 0 : index
    %c0_32 = arith.constant 0 : index
    %24 = vector.load %arg6[%c0_30, %c0_31, %c0_32] : memref<16x16x36xf32, #tpu.memory_space<vmem>>, vector<16x16x36xf32>
    %25 = vector.shape_cast %24 : vector<16x16x36xf32> to vector<256x36xf32>
    %c0_33 = arith.constant 0 : index
    %c0_34 = arith.constant 0 : index
    %26 = vector.load %arg2[%c0_33, %c0_34] : memref<36x4xf32, #tpu.memory_space<vmem>>, vector<36x4xf32>
    %cst_35 = arith.constant dense<0.000000e+00> : vector<256x4xf32>
    %27 = tpu.matmul %25, %26, %cst_35 {dimension_numbers = #tpu.dot_dimension_numbers<[1], [0], [0], [1], [0, 0, 1, 1], [], []>} : vector<256x36xf32>, vector<36x4xf32>, vector<256x4xf32> -> vector<256x4xf32>
    %28 = vector.shape_cast %27 : vector<256x4xf32> to vector<16x16x4xf32>
    %c0_36 = arith.constant 0 : index
    %c0_37 = arith.constant 0 : index
    %29 = vector.load %arg3[%c0_36, %c0_37] : memref<1x4xf32, #tpu.memory_space<vmem>>, vector<1x4xf32>
    %30 = vector.shape_cast %29 : vector<1x4xf32> to vector<1x1x4xf32>
    %31 = vector.broadcast %30 : vector<1x1x4xf32> to vector<16x16x4xf32>
    %32 = arith.addf %28, %31 : vector<16x16x4xf32>
    %33 = arith.addf %32, %1 : vector<16x16x4xf32>
    %c0_38 = arith.constant 0 : index
    %c0_39 = arith.constant 0 : index
    %c0_40 = arith.constant 0 : index
    %c0_41 = arith.constant 0 : index
    %34 = vector.load %arg4[%c0_38, %c0_39, %c0_40, %c0_41] : memref<1x16x16x4xf32, #tpu.memory_space<vmem>>, vector<1x16x16x4xf32>
    %35 = vector.shape_cast %34 : vector<1x16x16x4xf32> to vector<16x16x4xf32>
    %36 = vector.shape_cast %33 : vector<16x16x4xf32> to vector<1x16x16x4xf32>
    tpu.vector_store %arg4[%c0_38, %c0_39, %c0_40, %c0_41], %36 {strides = array<i32>} : memref<1x16x16x4xf32, #tpu.memory_space<vmem>>, vector<1x16x16x4xf32>,
    return
  }
  func.func @transform_0(%arg0: i32) -> (i32, i32, i32, i32) {
    %c0_i32 = arith.constant 0 : i32
    %c0_i32_0 = arith.constant 0 : i32
    %c0_i32_1 = arith.constant 0 : i32
    %c0_i32_2 = arith.constant 0 : i32
    return %arg0, %c0_i32, %c0_i32_0, %c0_i32_1 : i32, i32, i32, i32
  }
  func.func @transform_1(%arg0: i32) -> (i32, i32) {
    %c0_i32 = arith.constant 0 : i32
    %c0_i32_0 = arith.constant 0 : i32
    %c0_i32_1 = arith.constant 0 : i32
    return %c0_i32, %c0_i32_0 : i32, i32
  }
  func.func @transform_2(%arg0: i32) -> (i32, i32) {
    %c0_i32 = arith.constant 0 : i32
    %c0_i32_0 = arith.constant 0 : i32
    %c0_i32_1 = arith.constant 0 : i32
    return %c0_i32, %c0_i32_0 : i32, i32
  }
  func.func @transform_3(%arg0: i32) -> (i32, i32, i32, i32) {
    %c0_i32 = arith.constant 0 : i32
    %c0_i32_0 = arith.constant 0 : i32
    %c0_i32_1 = arith.constant 0 : i32
    %c0_i32_2 = arith.constant 0 : i32
    return %arg0, %c0_i32, %c0_i32_0, %c0_i32_1 : i32, i32, i32, i32
  }
}

</mosaic_0001>

<llo_original>
// kernel: tpu_custom_call.1
$region0: #{tpu_custom_call.1}
  #allocation0 [shape = 'u32[]', space=smem, size = 0x4, offset = 0x4, fixed_abs, tag = 'smem constant byte address 0x4 - core index']
  #allocation1 [shape = 'u32[144,128]{1,0:T(1,128)}', space=vmem, size = 0x12000, scoped, tag = 'internal scratch']
  #allocation2 [shape = 'f32[18,18,4]{2,1,0:T(8,128)}', space=vmem, size = 0x36000, scoped, tag = 'scratch operand']
  #allocation3 [shape = 'f32[16,16,36]{2,1,0:T(8,128)}', space=vmem, size = 0x20000, scoped, tag = 'scratch operand']
  %s0 = inlined_call_operand.vmem [shape: f32[2,16,16,4], index: 0, kind: input, shape index: {}]
  %s1 = inlined_call_operand.vmem [shape: f32[36,4], index: 1, kind: input, shape index: {}]
  %s2 = inlined_call_operand.vmem [shape: f32[1,4], index: 2, kind: input, shape index: {}]
  %s3 = inlined_call_operand.vmem [shape: f32[2,16,16,4], index: 3, kind: output, shape index: {}]
  %s4 = sld [smem:[#allocation0]]
  $region45: #{tpu_custom_call.1} parent=0
    _
  %s6 = ssub.s32 1, %s4
  %s7 = scalar_select 0, %s6, %s4
  loop: start=0, step=1, limit=4
  $region2: #{tpu_custom_call.1} parent=0 // loop_pre_header
    _
  $region3: #{tpu_custom_call.1} parent=0 // loop_header
    %s9 = sphi 0, %s13
    %p10 = scmp.ge.s32.totalorder %s9, 4
    %s19 = sphi 0, %s21
    %s22 = sphi 0, %s19
    %s23 = sphi 0, %s22
    %s39 = sphi 0, %s23
    %s43 = sphi 0, %s43
    %s45 = sphi 0, %s43
    %s46 = sphi 0, %s45
    %s60 = sphi 0, %s46
    %s64 = sphi 0, %s64
    %s66 = sphi 0, %s64
    %s67 = sphi 0, %s66
    %s81 = sphi 0, %s67
    %s87 = sphi 0, %s89
    %s90 = sphi 0, %s87
    %s91 = sphi 0, %s90
    %s107 = sphi 0, %s91
  $region4: #{tpu_custom_call.1} parent=0 // loop_header_branch
    %12 = sbr.rel (%p10) target = $region8
  $region5: #{tpu_custom_call.1} parent=0 // loop_body
    %s14 = ssub.s32 %s9, 1
    %s15 = ssub.s32 %s9, 2
    %s16 = sadd.s32 %s9, 1
    %s17 = ssub.s32 %s9, %s16
    %p18 = scmp.eq.s32.totalorder %s17, 0
    %s20 = sadd.s32 %s19, 1
    %s21 = scalar_select %p18, %s19, %s20
    %p24 = pneg %p18
    %p25 = scmp.eq.s32.totalorder %s9, 1
    %p26 = por %p24, %p25
    %p27 = scmp.ne.s32.totalorder %s19, %s22
    %p28 = scmp.eq.s32.totalorder %s9, 0
    %p29 = por %p27, %p28
    %p30 = scmp.ne.s32.totalorder %s19, %s22
    %p31 = scmp.eq.s32.totalorder %s14, 1
    %p32 = por %p30, %p31
    %p33 = scmp.ne.s32.totalorder %s22, %s23
    %p34 = scmp.eq.s32.totalorder %s14, 0
    %p35 = por %p33, %p34
    %p36 = scmp.ne.s32.totalorder %s22, %s23
    %p37 = scmp.eq.s32.totalorder %s15, 1
    %p38 = por %p36, %p37
    %p40 = scmp.ne.s32.totalorder %s23, %s39
    %p41 = scmp.eq.s32.totalorder %s15, 0
    %p42 = por %p40, %p41
    %s44 = sadd.s32 %s43, 1
    %p47 = scmp.eq.s32.totalorder %s9, 1
    %p48 = scmp.ne.s32.totalorder %s43, %s45
    %p49 = scmp.eq.s32.totalorder %s9, 0
    %p50 = por %p48, %p49
    %p51 = scmp.ne.s32.totalorder %s43, %s45
    %p52 = scmp.eq.s32.totalorder %s14, 1
    %p53 = por %p51, %p52
    %p54 = scmp.ne.s32.totalorder %s45, %s46
    %p55 = scmp.eq.s32.totalorder %s14, 0
    %p56 = por %p54, %p55
    %p57 = scmp.ne.s32.totalorder %s45, %s46
    %p58 = scmp.eq.s32.totalorder %s15, 1
    %p59 = por %p57, %p58
    %p61 = scmp.ne.s32.totalorder %s46, %s60
    %p62 = scmp.eq.s32.totalorder %s15, 0
    %p63 = por %p61, %p62
    %s65 = sadd.s32 %s64, 1
    %p68 = scmp.eq.s32.totalorder %s9, 1
    %p69 = scmp.ne.s32.totalorder %s64, %s66
    %p70 = scmp.eq.s32.totalorder %s9, 0
    %p71 = por %p69, %p70
    %p72 = scmp.ne.s32.totalorder %s64, %s66
    %p73 = scmp.eq.s32.totalorder %s14, 1
    %p74 = por %p72, %p73
    %p75 = scmp.ne.s32.totalorder %s66, %s67
    %p76 = scmp.eq.s32.totalorder %s14, 0
    %p77 = por %p75, %p76
    %p78 = scmp.ne.s32.totalorder %s66, %s67
    %p79 = scmp.eq.s32.totalorder %s15, 1
    %p80 = por %p78, %p79
    %p82 = scmp.ne.s32.totalorder %s67, %s81
    %p83 = scmp.eq.s32.totalorder %s15, 0
    %p84 = por %p82, %p83
    %s85 = ssub.s32 %s9, %s16
    %p86 = scmp.eq.s32.totalorder %s85, 0
    %s88 = sadd.s32 %s87, 1
    %s89 = scalar_select %p86, %s87, %s88
    %p92 = pneg %p86
    %p93 = scmp.eq.s32.totalorder %s9, 1
    %p94 = por %p92, %p93
    %p95 = scmp.ne.s32.totalorder %s87, %s90
    %p96 = scmp.eq.s32.totalorder %s9, 0
    %p97 = por %p95, %p96
    %p98 = scmp.ne.s32.totalorder %s87, %s90
    %p99 = scmp.eq.s32.totalorder %s14, 1
    %p100 = por %p98, %p99
    %p101 = scmp.ne.s32.totalorder %s90, %s91
    %p102 = scmp.eq.s32.totalorder %s14, 0
    %p103 = por %p101, %p102
    %p104 = scmp.ne.s32.totalorder %s90, %s91
    %p105 = scmp.eq.s32.totalorder %s15, 1
    %p106 = por %p104, %p105
    %p108 = scmp.ne.s32.totalorder %s91, %s107
    %p109 = scmp.eq.s32.totalorder %s15, 0
    %p110 = por %p108, %p109
    %p111 = scmp.le.s32.totalorder 1, %s9
    %p112 = scmp.lt.s32.totalorder %s9, 3
    %p113 = pnand %p111, %p112
    %p114 = pneg %p113
    // Predicated region
    $region9: #{tpu_custom_call.1} parent=5 // pred_check
      _
    $region10: #{tpu_custom_call.1} parent=5 // pred_check_branch
      %116 = sbr.rel (%p113) target = $region12
    $region11: #{tpu_custom_call.1} parent=5 // pred_region
      %s117 = ssub.s32 %s9, 1
      // Predicated region
      $region13: #{tpu_custom_call.1} parent=11 // pred_check
        %p118 = pneg %p56
      $region14: #{tpu_custom_call.1} parent=11 // pred_check_branch
        %120 = sbr.rel (%p118) target = $region16
      $region15: #{tpu_custom_call.1} parent=11 // pred_region
        _
      $region16: #{tpu_custom_call.1} parent=11 // pred_fallthru
        _
      // Predicated region
      $region17: #{tpu_custom_call.1} parent=11 // pred_check
        %p121 = pneg %p77
      $region18: #{tpu_custom_call.1} parent=11 // pred_check_branch
        %123 = sbr.rel (%p121) target = $region20
      $region19: #{tpu_custom_call.1} parent=11 // pred_region
        _
      $region20: #{tpu_custom_call.1} parent=11 // pred_fallthru
        _
    $region12: #{tpu_custom_call.1} parent=5 // pred_fallthru
      _
    %p124 = scmp.lt.s32.totalorder %s9, 2
    // Predicated region
    $region21: #{tpu_custom_call.1} parent=5 // pred_check
      %p125 = pneg %p124
    $region22: #{tpu_custom_call.1} parent=5 // pred_check_branch
      %127 = sbr.rel (%p125) target = $region24
    $region23: #{tpu_custom_call.1} parent=5 // pred_region
      // Predicated region
      $region25: #{tpu_custom_call.1} parent=23 // pred_check
        %p128 = pneg %p29
      $region26: #{tpu_custom_call.1} parent=23 // pred_check_branch
        %130 = sbr.rel (%p128) target = $region28
      $region27: #{tpu_custom_call.1} parent=23 // pred_region
        %p131 = scmp.lt.s32.totalorder %s9, 1
        %s132 = scalar_select %p131, %s9, 1
        %s133 = smul.addr %s132, 32
        %s134 = smul.addr %s133, 8
        %s135 = scalar_lea.vmem %s0, %s134
      $region28: #{tpu_custom_call.1} parent=23 // pred_fallthru
        _
    $region24: #{tpu_custom_call.1} parent=5 // pred_fallthru
      _
    %p136 = scmp.le.s32.totalorder 1, %s9
    %p137 = scmp.lt.s32.totalorder %s9, 3
    %p138 = pnand %p136, %p137
    %p139 = pneg %p138
    // Predicated region
    $region29: #{tpu_custom_call.1} parent=5 // pred_check
      _
    $region30: #{tpu_custom_call.1} parent=5 // pred_check_branch
      %141 = sbr.rel (%p138) target = $region32
    $region31: #{tpu_custom_call.1} parent=5 // pred_region
      %s142 = ssub.s32 %s9, 1
      %p143 = scmp.lt.s32.totalorder %s14, 1
      %s144 = scalar_select %p143, %s14, 1
      %s145 = smul.addr %s144, 32
      %s146 = smul.addr %s145, 8
      %s147 = scalar_lea.vmem %s0, %s146
      %p148 = pneg %p35
      %p149 = pneg %p32
      %p150 = pneg %p56
      %p151 = pneg %p53
      %p152 = pneg %p77
      %p153 = pneg %p74
      %p154 = pneg %p103
      %p155 = pneg %p100
      %p156 = scmp.lt.s32.totalorder %s14, 1
      %s157 = scalar_select %p156, %s14, 1
      %s158 = smul.addr %s157, 32
      %s159 = smul.addr %s158, 8
      %s160 = scalar_lea.vmem %s3, %s159
      %p161 = scmp.lt.s32.totalorder %s14, 1
      %s162 = scalar_select %p161, %s14, 1
      %s163 = smul.addr %s162, 32
      %s164 = smul.addr %s163, 8
      %s165 = scalar_lea.vmem %s0, %s164
      %p166 = scmp.lt.s32.totalorder %s14, 1
      %s167 = scalar_select %p166, %s14, 1
      %s168 = smul.addr %s167, 32
      %s169 = smul.addr %s168, 8
      %s170 = scalar_lea.vmem %s3, %s169
      %v171 = vld [vmem:[%s165] sm:$0xff]
      %v172 = vld [vmem:[%s165 + $0x8] sm:$0xff]
      %v173 = vld [vmem:[%s165 + $0x10] sm:$0xff]
      %v174 = vld [vmem:[%s165 + $0x18] sm:$0xff]
      %v175 = vld [vmem:[%s165 + $0x20] sm:$0xff]
      %v176 = vld [vmem:[%s165 + $0x28] sm:$0xff]
      %v177 = vld [vmem:[%s165 + $0x30] sm:$0xff]
      %v178 = vld [vmem:[%s165 + $0x38] sm:$0xff]
      %v179 = vld [vmem:[%s165 + $0x40] sm:$0xff]
      %v180 = vld [vmem:[%s165 + $0x48] sm:$0xff]
      %v181 = vld [vmem:[%s165 + $0x50] sm:$0xff]
      %v182 = vld [vmem:[%s165 + $0x58] sm:$0xff]
      %v183 = vld [vmem:[%s165 + $0x60] sm:$0xff]
      %v184 = vld [vmem:[%s165 + $0x68] sm:$0xff]
      %v185 = vld [vmem:[%s165 + $0x70] sm:$0xff]
      %v186 = vld [vmem:[%s165 + $0x78] sm:$0xff]
      %v187 = vld [vmem:[%s165 + $0x80] sm:$0xff]
      %v188 = vld [vmem:[%s165 + $0x88] sm:$0xff]
      %v189 = vld [vmem:[%s165 + $0x90] sm:$0xff]
      %v190 = vld [vmem:[%s165 + $0x98] sm:$0xff]
      %v191 = vld [vmem:[%s165 + $0xa0] sm:$0xff]
      %v192 = vld [vmem:[%s165 + $0xa8] sm:$0xff]
      %v193 = vld [vmem:[%s165 + $0xb0] sm:$0xff]
      %v194 = vld [vmem:[%s165 + $0xb8] sm:$0xff]
      %v195 = vld [vmem:[%s165 + $0xc0] sm:$0xff]
      %v196 = vld [vmem:[%s165 + $0xc8] sm:$0xff]
      %v197 = vld [vmem:[%s165 + $0xd0] sm:$0xff]
      %v198 = vld [vmem:[%s165 + $0xd8] sm:$0xff]
      %v199 = vld [vmem:[%s165 + $0xe0] sm:$0xff]
      %v200 = vld [vmem:[%s165 + $0xe8] sm:$0xff]
      %v201 = vld [vmem:[%s165 + $0xf0] sm:$0xff]
      %v202 = vld [vmem:[%s165 + $0xf8] sm:$0xff]
      %vm203 = vcmask 31744
      %204 = vst.msk [vmem:[#allocation2] sm:$0xff] %vm203, 0.0
      %205 = vst.msk [vmem:[#allocation2 + $0x8] sm:$0xff] %vm203, 0.0
      %vm206 = vcmask 25600
      %207 = vst.msk [vmem:[#allocation2 + $0x10] sm:$0x3] %vm206, 0.0
      %208 = vst.msk [vmem:[#allocation2 + $0x18] sm:$0xff] %vm203, 0.0
      %209 = vst.msk [vmem:[#allocation2 + $0x20] sm:$0xff] %vm203, 0.0
      %210 = vst.msk [vmem:[#allocation2 + $0x28] sm:$0x3] %vm206, 0.0
      %211 = vst.msk [vmem:[#allocation2 + $0x30] sm:$0xff] %vm203, 0.0
      %212 = vst.msk [vmem:[#allocation2 + $0x38] sm:$0xff] %vm203, 0.0
      %213 = vst.msk [vmem:[#allocation2 + $0x40] sm:$0x3] %vm206, 0.0
      %214 = vst.msk [vmem:[#allocation2 + $0x48] sm:$0xff] %vm203, 0.0
      %215 = vst.msk [vmem:[#allocation2 + $0x50] sm:$0xff] %vm203, 0.0
      %216 = vst.msk [vmem:[#allocation2 + $0x58] sm:$0x3] %vm206, 0.0
      %217 = vst.msk [vmem:[#allocation2 + $0x60] sm:$0xff] %vm203, 0.0
      %218 = vst.msk [vmem:[#allocation2 + $0x68] sm:$0xff] %vm203, 0.0
      %219 = vst.msk [vmem:[#allocation2 + $0x70] sm:$0x3] %vm206, 0.0
      %220 = vst.msk [vmem:[#allocation2 + $0x78] sm:$0xff] %vm203, 0.0
      %221 = vst.msk [vmem:[#allocation2 + $0x80] sm:$0xff] %vm203, 0.0
      %222 = vst.msk [vmem:[#allocation2 + $0x88] sm:$0x3] %vm206, 0.0
      %223 = vst.msk [vmem:[#allocation2 + $0x90] sm:$0xff] %vm203, 0.0
      %224 = vst.msk [vmem:[#allocation2 + $0x98] sm:$0xff] %vm203, 0.0
      %225 = vst.msk [vmem:[#allocation2 + $0xa0] sm:$0x3] %vm206, 0.0
      %226 = vst.msk [vmem:[#allocation2 + $0xa8] sm:$0xff] %vm203, 0.0
      %227 = vst.msk [vmem:[#allocation2 + $0xb0] sm:$0xff] %vm203, 0.0
      %228 = vst.msk [vmem:[#allocation2 + $0xb8] sm:$0x3] %vm206, 0.0
      %229 = vst.msk [vmem:[#allocation2 + $0xc0] sm:$0xff] %vm203, 0.0
      %230 = vst.msk [vmem:[#allocation2 + $0xc8] sm:$0xff] %vm203, 0.0
      %231 = vst.msk [vmem:[#allocation2 + $0xd0] sm:$0x3] %vm206, 0.0
      %232 = vst.msk [vmem:[#allocation2 + $0xd8] sm:$0xff] %vm203, 0.0
      %233 = vst.msk [vmem:[#allocation2 + $0xe0] sm:$0xff] %vm203, 0.0
      %234 = vst.msk [vmem:[#allocation2 + $0xe8] sm:$0x3] %vm206, 0.0
      %235 = vst.msk [vmem:[#allocation2 + $0xf0] sm:$0xff] %vm203, 0.0
      %236 = vst.msk [vmem:[#allocation2 + $0xf8] sm:$0xff] %vm203, 0.0
      %237 = vst.msk [vmem:[#allocation2 + $0x100] sm:$0x3] %vm206, 0.0
      %238 = vst.msk [vmem:[#allocation2 + $0x108] sm:$0xff] %vm203, 0.0
      %239 = vst.msk [vmem:[#allocation2 + $0x110] sm:$0xff] %vm203, 0.0
      %240 = vst.msk [vmem:[#allocation2 + $0x118] sm:$0x3] %vm206, 0.0
      %241 = vst.msk [vmem:[#allocation2 + $0x120] sm:$0xff] %vm203, 0.0
      %242 = vst.msk [vmem:[#allocation2 + $0x128] sm:$0xff] %vm203, 0.0
      %243 = vst.msk [vmem:[#allocation2 + $0x130] sm:$0x3] %vm206, 0.0
      %244 = vst.msk [vmem:[#allocation2 + $0x138] sm:$0xff] %vm203, 0.0
      %245 = vst.msk [vmem:[#allocation2 + $0x140] sm:$0xff] %vm203, 0.0
      %246 = vst.msk [vmem:[#allocation2 + $0x148] sm:$0x3] %vm206, 0.0
      %247 = vst.msk [vmem:[#allocation2 + $0x150] sm:$0xff] %vm203, 0.0
      %248 = vst.msk [vmem:[#allocation2 + $0x158] sm:$0xff] %vm203, 0.0
      %249 = vst.msk [vmem:[#allocation2 + $0x160] sm:$0x3] %vm206, 0.0
      %250 = vst.msk [vmem:[#allocation2 + $0x168] sm:$0xff] %vm203, 0.0
      %251 = vst.msk [vmem:[#allocation2 + $0x170] sm:$0xff] %vm203, 0.0
      %252 = vst.msk [vmem:[#allocation2 + $0x178] sm:$0x3] %vm206, 0.0
      %253 = vst.msk [vmem:[#allocation2 + $0x180] sm:$0xff] %vm203, 0.0
      %254 = vst.msk [vmem:[#allocation2 + $0x188] sm:$0xff] %vm203, 0.0
      %255 = vst.msk [vmem:[#allocation2 + $0x190] sm:$0x3] %vm206, 0.0
      %256 = vst.msk [vmem:[#allocation2 + $0x198] sm:$0xff] %vm203, 0.0
      %257 = vst.msk [vmem:[#allocation2 + $0x1a0] sm:$0xff] %vm203, 0.0
      %258 = vst.msk [vmem:[#allocation2 + $0x1a8] sm:$0x3] %vm206, 0.0
      %s259 = scalar_lea.vmem [#allocation2], 24
      %260 = vst.msk [vmem:[%s259 + $0x1] sm:$0xff] %vm203, %v171
      %261 = vst.msk [vmem:[%s259 + $0x9] sm:$0xff] %vm203, %v172
      %262 = vst.msk [vmem:[%s259 + $0x19] sm:$0xff] %vm203, %v173
      %263 = vst.msk [vmem:[%s259 + $0x21] sm:$0xff] %vm203, %v174
      %264 = vst.msk [vmem:[%s259 + $0x31] sm:$0xff] %vm203, %v175
      %265 = vst.msk [vmem:[%s259 + $0x39] sm:$0xff] %vm203, %v176
      %266 = vst.msk [vmem:[%s259 + $0x49] sm:$0xff] %vm203, %v177
      %267 = vst.msk [vmem:[%s259 + $0x51] sm:$0xff] %vm203, %v178
      %268 = vst.msk [vmem:[%s259 + $0x61] sm:$0xff] %vm203, %v179
      %269 = vst.msk [vmem:[%s259 + $0x69] sm:$0xff] %vm203, %v180
      %270 = vst.msk [vmem:[%s259 + $0x79] sm:$0xff] %vm203, %v181
      %271 = vst.msk [vmem:[%s259 + $0x81] sm:$0xff] %vm203, %v182
      %272 = vst.msk [vmem:[%s259 + $0x91] sm:$0xff] %vm203, %v183
      %273 = vst.msk [vmem:[%s259 + $0x99] sm:$0xff] %vm203, %v184
      %274 = vst.msk [vmem:[%s259 + $0xa9] sm:$0xff] %vm203, %v185
      %275 = vst.msk [vmem:[%s259 + $0xb1] sm:$0xff] %vm203, %v186
      %276 = vst.msk [vmem:[%s259 + $0xc1] sm:$0xff] %vm203, %v187
      %277 = vst.msk [vmem:[%s259 + $0xc9] sm:$0xff] %vm203, %v188
      %278 = vst.msk [vmem:[%s259 + $0xd9] sm:$0xff] %vm203, %v189
      %279 = vst.msk [vmem:[%s259 + $0xe1] sm:$0xff] %vm203, %v190
      %280 = vst.msk [vmem:[%s259 + $0xf1] sm:$0xff] %vm203, %v191
      %281 = vst.msk [vmem:[%s259 + $0xf9] sm:$0xff] %vm203, %v192
      %282 = vst.msk [vmem:[%s259 + $0x109] sm:$0xff] %vm203, %v193
      %283 = vst.msk [vmem:[%s259 + $0x111] sm:$0xff] %vm203, %v194
      %284 = vst.msk [vmem:[%s259 + $0x121] sm:$0xff] %vm203, %v195
      %285 = vst.msk [vmem:[%s259 + $0x129] sm:$0xff] %vm203, %v196
      %286 = vst.msk [vmem:[%s259 + $0x139] sm:$0xff] %vm203, %v197
      %287 = vst.msk [vmem:[%s259 + $0x141] sm:$0xff] %vm203, %v198
      %288 = vst.msk [vmem:[%s259 + $0x151] sm:$0xff] %vm203, %v199
      %289 = vst.msk [vmem:[%s259 + $0x159] sm:$0xff] %vm203, %v200
      %290 = vst.msk [vmem:[%s259 + $0x169] sm:$0xff] %vm203, %v201
      %291 = vst.msk [vmem:[%s259 + $0x171] sm:$0xff] %vm203, %v202
      %v292 = vld [vmem:[#allocation2] sm:$0xff]
      %v293 = vld [vmem:[#allocation2 + $0x8] sm:$0xff]
      %v294 = vld [vmem:[#allocation2 + $0x10] sm:$0x3]
      %v295 = vld [vmem:[#allocation2 + $0x18] sm:$0xff]
      %v296 = vld [vmem:[#allocation2 + $0x20] sm:$0xff]
      %v297 = vld [vmem:[#allocation2 + $0x28] sm:$0x3]
      %v298 = vld [vmem:[#allocation2 + $0x30] sm:$0xff]
      %v299 = vld [vmem:[#allocation2 + $0x38] sm:$0xff]
      %v300 = vld [vmem:[#allocation2 + $0x40] sm:$0x3]
      %v301 = vld [vmem:[#allocation2 + $0x48] sm:$0xff]
      %v302 = vld [vmem:[#allocation2 + $0x50] sm:$0xff]
      %v303 = vld [vmem:[#allocation2 + $0x58] sm:$0x3]
      %v304 = vld [vmem:[#allocation2 + $0x60] sm:$0xff]
      %v305 = vld [vmem:[#allocation2 + $0x68] sm:$0xff]
      %v306 = vld [vmem:[#allocation2 + $0x70] sm:$0x3]
      %v307 = vld [vmem:[#allocation2 + $0x78] sm:$0xff]
      %v308 = vld [vmem:[#allocation2 + $0x80] sm:$0xff]
      %v309 = vld [vmem:[#allocation2 + $0x88] sm:$0x3]
      %v310 = vld [vmem:[#allocation2 + $0x90] sm:$0xff]
      %v311 = vld [vmem:[#allocation2 + $0x98] sm:$0xff]
      %v312 = vld [vmem:[#allocation2 + $0xa0] sm:$0x3]
      %v313 = vld [vmem:[#allocation2 + $0xa8] sm:$0xff]
      %v314 = vld [vmem:[#allocation2 + $0xb0] sm:$0xff]
      %v315 = vld [vmem:[#allocation2 + $0xb8] sm:$0x3]
      %v316 = vld [vmem:[#allocation2 + $0xc0] sm:$0xff]
      %v317 = vld [vmem:[#allocation2 + $0xc8] sm:$0xff]
      %v318 = vld [vmem:[#allocation2 + $0xd0] sm:$0x3]
      %v319 = vld [vmem:[#allocation2 + $0xd8] sm:$0xff]
      %v320 = vld [vmem:[#allocation2 + $0xe0] sm:$0xff]
      %v321 = vld [vmem:[#allocation2 + $0xe8] sm:$0x3]
      %v322 = vld [vmem:[#allocation2 + $0xf0] sm:$0xff]
      %v323 = vld [vmem:[#allocation2 + $0xf8] sm:$0xff]
      %v324 = vld [vmem:[#allocation2 + $0x100] sm:$0x3]
      %v325 = vld [vmem:[#allocation2 + $0x108] sm:$0xff]
      %v326 = vld [vmem:[#allocation2 + $0x110] sm:$0xff]
      %v327 = vld [vmem:[#allocation2 + $0x118] sm:$0x3]
      %v328 = vld [vmem:[#allocation2 + $0x120] sm:$0xff]
      %v329 = vld [vmem:[#allocation2 + $0x128] sm:$0xff]
      %v330 = vld [vmem:[#allocation2 + $0x130] sm:$0x3]
      %v331 = vld [vmem:[#allocation2 + $0x138] sm:$0xff]
      %v332 = vld [vmem:[#allocation2 + $0x140] sm:$0xff]
      %v333 = vld [vmem:[#allocation2 + $0x148] sm:$0x3]
      %v334 = vld [vmem:[#allocation2 + $0x150] sm:$0xff]
      %v335 = vld [vmem:[#allocation2 + $0x158] sm:$0xff]
      %v336 = vld [vmem:[#allocation2 + $0x160] sm:$0x3]
      %v337 = vld [vmem:[#allocation2 + $0x168] sm:$0xff]
      %v338 = vld [vmem:[#allocation2 + $0x170] sm:$0xff]
      %v339 = vld [vmem:[#allocation2 + $0x178] sm:$0x3]
      %v340 = vld [vmem:[#allocation2 + $0x180] sm:$0xff]
      %v341 = vld [vmem:[#allocation2 + $0x188] sm:$0xff]
      %v342 = vld [vmem:[#allocation2 + $0x190] sm:$0x3]
      %v343 = vld [vmem:[#allocation2 + $0x198] sm:$0xff]
      %v344 = vld [vmem:[#allocation2 + $0x1a0] sm:$0xff]
      %v345 = vld [vmem:[#allocation2 + $0x1a8] sm:$0x3]
      %346 = vst.msk [vmem:[#allocation3] sm:$0xff] %vm203, %v292
      %347 = vst.msk [vmem:[#allocation3 + $0x8] sm:$0xff] %vm203, %v293
      %348 = vst.msk [vmem:[#allocation3 + $0x10] sm:$0xff] %vm203, %v295
      %349 = vst.msk [vmem:[#allocation3 + $0x18] sm:$0xff] %vm203, %v296
      %350 = vst.msk [vmem:[#allocation3 + $0x20] sm:$0xff] %vm203, %v298
      %351 = vst.msk [vmem:[#allocation3 + $0x28] sm:$0xff] %vm203, %v299
      %352 = vst.msk [vmem:[#allocation3 + $0x30] sm:$0xff] %vm203, %v301
      %353 = vst.msk [vmem:[#allocation3 + $0x38] sm:$0xff] %vm203, %v302
      %354 = vst.msk [vmem:[#allocation3 + $0x40] sm:$0xff] %vm203, %v304
      %355 = vst.msk [vmem:[#allocation3 + $0x48] sm:$0xff] %vm203, %v305
      %356 = vst.msk [vmem:[#allocation3 + $0x50] sm:$0xff] %vm203, %v307
      %357 = vst.msk [vmem:[#allocation3 + $0x58] sm:$0xff] %vm203, %v308
      %358 = vst.msk [vmem:[#allocation3 + $0x60] sm:$0xff] %vm203, %v310
      %359 = vst.msk [vmem:[#allocation3 + $0x68] sm:$0xff] %vm203, %v311
      %360 = vst.msk [vmem:[#allocation3 + $0x70] sm:$0xff] %vm203, %v313
      %361 = vst.msk [vmem:[#allocation3 + $0x78] sm:$0xff] %vm203, %v314
      %362 = vst.msk [vmem:[#allocation3 + $0x80] sm:$0xff] %vm203, %v316
      %363 = vst.msk [vmem:[#allocation3 + $0x88] sm:$0xff] %vm203, %v317
      %364 = vst.msk [vmem:[#allocation3 + $0x90] sm:$0xff] %vm203, %v319
      %365 = vst.msk [vmem:[#allocation3 + $0x98] sm:$0xff] %vm203, %v320
      %366 = vst.msk [vmem:[#allocation3 + $0xa0] sm:$0xff] %vm203, %v322
      %367 = vst.msk [vmem:[#allocation3 + $0xa8] sm:$0xff] %vm203, %v323
      %368 = vst.msk [vmem:[#allocation3 + $0xb0] sm:$0xff] %vm203, %v325
      %369 = vst.msk [vmem:[#allocation3 + $0xb8] sm:$0xff] %vm203, %v326
      %370 = vst.msk [vmem:[#allocation3 + $0xc0] sm:$0xff] %vm203, %v328
      %371 = vst.msk [vmem:[#allocation3 + $0xc8] sm:$0xff] %vm203, %v329
      %372 = vst.msk [vmem:[#allocation3 + $0xd0] sm:$0xff] %vm203, %v331
      %373 = vst.msk [vmem:[#allocation3 + $0xd8] sm:$0xff] %vm203, %v332
      %374 = vst.msk [vmem:[#allocation3 + $0xe0] sm:$0xff] %vm203, %v334
      %375 = vst.msk [vmem:[#allocation3 + $0xe8] sm:$0xff] %vm203, %v335
      %376 = vst.msk [vmem:[#allocation3 + $0xf0] sm:$0xff] %vm203, %v337
      %377 = vst.msk [vmem:[#allocation3 + $0xf8] sm:$0xff] %vm203, %v338
      %426 = vrot.lane.b32.xlu0 %v292, 4
      %v427 = vpop.permute.xlu0 %426
      %428 = vrot.lane.b32.xlu0 %v293, 4
      %v429 = vpop.permute.xlu0 %428
      %430 = vrot.lane.b32.xlu0 %v294, 4
      %v431 = vpop.permute.xlu0 %430
      %432 = vrot.lane.b32.xlu0 %v295, 4
      %v433 = vpop.permute.xlu0 %432
      %434 = vrot.lane.b32.xlu0 %v296, 4
      %v435 = vpop.permute.xlu0 %434
      %436 = vrot.lane.b32.xlu0 %v297, 4
      %v437 = vpop.permute.xlu0 %436
      %438 = vrot.lane.b32.xlu0 %v298, 4
      %v439 = vpop.permute.xlu0 %438
      %440 = vrot.lane.b32.xlu0 %v299, 4
      %v441 = vpop.permute.xlu0 %440
      %442 = vrot.lane.b32.xlu0 %v300, 4
      %v443 = vpop.permute.xlu0 %442
      %444 = vrot.lane.b32.xlu0 %v301, 4
      %v445 = vpop.permute.xlu0 %444
      %446 = vrot.lane.b32.xlu0 %v302, 4
      %v447 = vpop.permute.xlu0 %446
      %448 = vrot.lane.b32.xlu0 %v303, 4
      %v449 = vpop.permute.xlu0 %448
      %450 = vrot.lane.b32.xlu0 %v304, 4
      %v451 = vpop.permute.xlu0 %450
      %452 = vrot.lane.b32.xlu0 %v305, 4
      %v453 = vpop.permute.xlu0 %452
      %454 = vrot.lane.b32.xlu0 %v306, 4
      %v455 = vpop.permute.xlu0 %454
      %456 = vrot.lane.b32.xlu0 %v307, 4
      %v457 = vpop.permute.xlu0 %456
      %458 = vrot.lane.b32.xlu0 %v308, 4
      %v459 = vpop.permute.xlu0 %458
      %460 = vrot.lane.b32.xlu0 %v309, 4
      %v461 = vpop.permute.xlu0 %460
      %462 = vrot.lane.b32.xlu0 %v310, 4
      %v463 = vpop.permute.xlu0 %462
      %464 = vrot.lane.b32.xlu0 %v311, 4
      %v465 = vpop.permute.xlu0 %464
      %466 = vrot.lane.b32.xlu0 %v312, 4
      %v467 = vpop.permute.xlu0 %466
      %468 = vrot.lane.b32.xlu0 %v313, 4
      %v469 = vpop.permute.xlu0 %468
      %470 = vrot.lane.b32.xlu0 %v314, 4
      %v471 = vpop.permute.xlu0 %470
      %472 = vrot.lane.b32.xlu0 %v315, 4
      %v473 = vpop.permute.xlu0 %472
      %474 = vrot.lane.b32.xlu0 %v316, 4
      %v475 = vpop.permute.xlu0 %474
      %476 = vrot.lane.b32.xlu0 %v317, 4
      %v477 = vpop.permute.xlu0 %476
      %478 = vrot.lane.b32.xlu0 %v318, 4
      %v479 = vpop.permute.xlu0 %478
      %480 = vrot.lane.b32.xlu0 %v319, 4
      %v481 = vpop.permute.xlu0 %480
      %482 = vrot.lane.b32.xlu0 %v320, 4
      %v483 = vpop.permute.xlu0 %482
      %484 = vrot.lane.b32.xlu0 %v321, 4
      %v485 = vpop.permute.xlu0 %484
      %486 = vrot.lane.b32.xlu0 %v322, 4
      %v487 = vpop.permute.xlu0 %486
      %488 = vrot.lane.b32.xlu0 %v323, 4
      %v489 = vpop.permute.xlu0 %488
      %490 = vrot.lane.b32.xlu0 %v324, 4
      %v491 = vpop.permute.xlu0 %490
      %492 = vrot.lane.b32.xlu0 %v325, 4
      %v493 = vpop.permute.xlu0 %492
      %494 = vrot.lane.b32.xlu0 %v326, 4
      %v495 = vpop.permute.xlu0 %494
      %496 = vrot.lane.b32.xlu0 %v327, 4
      %v497 = vpop.permute.xlu0 %496
      %498 = vrot.lane.b32.xlu0 %v328, 4
      %v499 = vpop.permute.xlu0 %498
      %500 = vrot.lane.b32.xlu0 %v329, 4
      %v501 = vpop.permute.xlu0 %500
      %502 = vrot.lane.b32.xlu0 %v330, 4
      %v503 = vpop.permute.xlu0 %502
      %504 = vrot.lane.b32.xlu0 %v331, 4
      %v505 = vpop.permute.xlu0 %504
      %506 = vrot.lane.b32.xlu0 %v332, 4
      %v507 = vpop.permute.xlu0 %506
      %508 = vrot.lane.b32.xlu0 %v333, 4
      %v509 = vpop.permute.xlu0 %508
      %510 = vrot.lane.b32.xlu0 %v334, 4
      %v511 = vpop.permute.xlu0 %510
      %512 = vrot.lane.b32.xlu0 %v335, 4
      %v513 = vpop.permute.xlu0 %512
      %514 = vrot.lane.b32.xlu0 %v336, 4
      %v515 = vpop.permute.xlu0 %514
      %516 = vrot.lane.b32.xlu0 %v337, 4
      %v517 = vpop.permute.xlu0 %516
      %518 = vrot.lane.b32.xlu0 %v338, 4
      %v519 = vpop.permute.xlu0 %518
      %520 = vrot.lane.b32.xlu0 %v339, 4
      %v521 = vpop.permute.xlu0 %520
      %vm570 = vcmask 64545
      %571 = vst.msk [vmem:[#allocation3 - $0x1] sm:$0xfe] %vm570, %v427
      %vm572 = vcmask 64544
      %573 = vst.msk [vmem:[#allocation3 + $0x7] sm:$0xff] %vm572, %v429
      %vm574 = vcmask 57376
      %575 = vst.msk [vmem:[#allocation3 + $0xf] sm:$0x1] %vm574, %v431
      %576 = vst.msk [vmem:[#allocation3 + $0xf] sm:$0xfe] %vm570, %v433
      %577 = vst.msk [vmem:[#allocation3 + $0x17] sm:$0xff] %vm572, %v435
      %578 = vst.msk [vmem:[#allocation3 + $0x1f] sm:$0x1] %vm574, %v437
      %579 = vst.msk [vmem:[#allocation3 + $0x1f] sm:$0xfe] %vm570, %v439
      %580 = vst.msk [vmem:[#allocation3 + $0x27] sm:$0xff] %vm572, %v441
      %581 = vst.msk [vmem:[#allocation3 + $0x2f] sm:$0x1] %vm574, %v443
      %582 = vst.msk [vmem:[#allocation3 + $0x2f] sm:$0xfe] %vm570, %v445
      %583 = vst.msk [vmem:[#allocation3 + $0x37] sm:$0xff] %vm572, %v447
      %584 = vst.msk [vmem:[#allocation3 + $0x3f] sm:$0x1] %vm574, %v449
      %585 = vst.msk [vmem:[#allocation3 + $0x3f] sm:$0xfe] %vm570, %v451
      %586 = vst.msk [vmem:[#allocation3 + $0x47] sm:$0xff] %vm572, %v453
      %587 = vst.msk [vmem:[#allocation3 + $0x4f] sm:$0x1] %vm574, %v455
      %588 = vst.msk [vmem:[#allocation3 + $0x4f] sm:$0xfe] %vm570, %v457
      %589 = vst.msk [vmem:[#allocation3 + $0x57] sm:$0xff] %vm572, %v459
      %590 = vst.msk [vmem:[#allocation3 + $0x5f] sm:$0x1] %vm574, %v461
      %591 = vst.msk [vmem:[#allocation3 + $0x5f] sm:$0xfe] %vm570, %v463
      %592 = vst.msk [vmem:[#allocation3 + $0x67] sm:$0xff] %vm572, %v465
      %593 = vst.msk [vmem:[#allocation3 + $0x6f] sm:$0x1] %vm574, %v467
      %594 = vst.msk [vmem:[#allocation3 + $0x6f] sm:$0xfe] %vm570, %v469
      %595 = vst.msk [vmem:[#allocation3 + $0x77] sm:$0xff] %vm572, %v471
      %596 = vst.msk [vmem:[#allocation3 + $0x7f] sm:$0x1] %vm574, %v473
      %597 = vst.msk [vmem:[#allocation3 + $0x7f] sm:$0xfe] %vm570, %v475
      %598 = vst.msk [vmem:[#allocation3 + $0x87] sm:$0xff] %vm572, %v477
      %599 = vst.msk [vmem:[#allocation3 + $0x8f] sm:$0x1] %vm574, %v479
      %600 = vst.msk [vmem:[#allocation3 + $0x8f] sm:$0xfe] %vm570, %v481
      %601 = vst.msk [vmem:[#allocation3 + $0x97] sm:$0xff] %vm572, %v483
      %602 = vst.msk [vmem:[#allocation3 + $0x9f] sm:$0x1] %vm574, %v485
      %603 = vst.msk [vmem:[#allocation3 + $0x9f] sm:$0xfe] %vm570, %v487
      %604 = vst.msk [vmem:[#allocation3 + $0xa7] sm:$0xff] %vm572, %v489
      %605 = vst.msk [vmem:[#allocation3 + $0xaf] sm:$0x1] %vm574, %v491
      %606 = vst.msk [vmem:[#allocation3 + $0xaf] sm:$0xfe] %vm570, %v493
      %607 = vst.msk [vmem:[#allocation3 + $0xb7] sm:$0xff] %vm572, %v495
      %608 = vst.msk [vmem:[#allocation3 + $0xbf] sm:$0x1] %vm574, %v497
      %609 = vst.msk [vmem:[#allocation3 + $0xbf] sm:$0xfe] %vm570, %v499
      %610 = vst.msk [vmem:[#allocation3 + $0xc7] sm:$0xff] %vm572, %v501
      %611 = vst.msk [vmem:[#allocation3 + $0xcf] sm:$0x1] %vm574, %v503
      %612 = vst.msk [vmem:[#allocation3 + $0xcf] sm:$0xfe] %vm570, %v505
      %613 = vst.msk [vmem:[#allocation3 + $0xd7] sm:$0xff] %vm572, %v507
      %614 = vst.msk [vmem:[#allocation3 + $0xdf] sm:$0x1] %vm574, %v509
      %615 = vst.msk [vmem:[#allocation3 + $0xdf] sm:$0xfe] %vm570, %v511
      %616 = vst.msk [vmem:[#allocation3 + $0xe7] sm:$0xff] %vm572, %v513
      %617 = vst.msk [vmem:[#allocation3 + $0xef] sm:$0x1] %vm574, %v515
      %618 = vst.msk [vmem:[#allocation3 + $0xef] sm:$0xfe] %vm570, %v517
      %619 = vst.msk [vmem:[#allocation3 + $0xf7] sm:$0xff] %vm572, %v519
      %620 = vst.msk [vmem:[#allocation3 + $0xff] sm:$0x1] %vm574, %v521
      %621 = vrot.lane.b32.xlu0 %v292, 8
      %v622 = vpop.permute.xlu0 %621
      %623 = vrot.lane.b32.xlu0 %v293, 8
      %v624 = vpop.permute.xlu0 %623
      %625 = vrot.lane.b32.xlu0 %v294, 8
      %v626 = vpop.permute.xlu0 %625
      %627 = vrot.lane.b32.xlu0 %v295, 8
      %v628 = vpop.permute.xlu0 %627
      %629 = vrot.lane.b32.xlu0 %v296, 8
      %v630 = vpop.permute.xlu0 %629
      %631 = vrot.lane.b32.xlu0 %v297, 8
      %v632 = vpop.permute.xlu0 %631
      %633 = vrot.lane.b32.xlu0 %v298, 8
      %v634 = vpop.permute.xlu0 %633
      %635 = vrot.lane.b32.xlu0 %v299, 8
      %v636 = vpop.permute.xlu0 %635
      %637 = vrot.lane.b32.xlu0 %v300, 8
      %v638 = vpop.permute.xlu0 %637
      %639 = vrot.lane.b32.xlu0 %v301, 8
      %v640 = vpop.permute.xlu0 %639
      %641 = vrot.lane.b32.xlu0 %v302, 8
      %v642 = vpop.permute.xlu0 %641
      %643 = vrot.lane.b32.xlu0 %v303, 8
      %v644 = vpop.permute.xlu0 %643
      %645 = vrot.lane.b32.xlu0 %v304, 8
      %v646 = vpop.permute.xlu0 %645
      %647 = vrot.lane.b32.xlu0 %v305, 8
      %v648 = vpop.permute.xlu0 %647
      %649 = vrot.lane.b32.xlu0 %v306, 8
      %v650 = vpop.permute.xlu0 %649
      %651 = vrot.lane.b32.xlu0 %v307, 8
      %v652 = vpop.permute.xlu0 %651
      %653 = vrot.lane.b32.xlu0 %v308, 8
      %v654 = vpop.permute.xlu0 %653
      %655 = vrot.lane.b32.xlu0 %v309, 8
      %v656 = vpop.permute.xlu0 %655
      %657 = vrot.lane.b32.xlu0 %v310, 8
      %v658 = vpop.permute.xlu0 %657
      %659 = vrot.lane.b32.xlu0 %v311, 8
      %v660 = vpop.permute.xlu0 %659
      %661 = vrot.lane.b32.xlu0 %v312, 8
      %v662 = vpop.permute.xlu0 %661
      %663 = vrot.lane.b32.xlu0 %v313, 8
      %v664 = vpop.permute.xlu0 %663
      %665 = vrot.lane.b32.xlu0 %v314, 8
      %v666 = vpop.permute.xlu0 %665
      %667 = vrot.lane.b32.xlu0 %v315, 8
      %v668 = vpop.permute.xlu0 %667
      %669 = vrot.lane.b32.xlu0 %v316, 8
      %v670 = vpop.permute.xlu0 %669
      %671 = vrot.lane.b32.xlu0 %v317, 8
      %v672 = vpop.permute.xlu0 %671
      %673 = vrot.lane.b32.xlu0 %v318, 8
      %v674 = vpop.permute.xlu0 %673
      %675 = vrot.lane.b32.xlu0 %v319, 8
      %v676 = vpop.permute.xlu0 %675
      %677 = vrot.lane.b32.xlu0 %v320, 8
      %v678 = vpop.permute.xlu0 %677
      %679 = vrot.lane.b32.xlu0 %v321, 8
      %v680 = vpop.permute.xlu0 %679
      %681 = vrot.lane.b32.xlu0 %v322, 8
      %v682 = vpop.permute.xlu0 %681
      %683 = vrot.lane.b32.xlu0 %v323, 8
      %v684 = vpop.permute.xlu0 %683
      %685 = vrot.lane.b32.xlu0 %v324, 8
      %v686 = vpop.permute.xlu0 %685
      %687 = vrot.lane.b32.xlu0 %v325, 8
      %v688 = vpop.permute.xlu0 %687
      %689 = vrot.lane.b32.xlu0 %v326, 8
      %v690 = vpop.permute.xlu0 %689
      %691 = vrot.lane.b32.xlu0 %v327, 8
      %v692 = vpop.permute.xlu0 %691
      %693 = vrot.lane.b32.xlu0 %v328, 8
      %v694 = vpop.permute.xlu0 %693
      %695 = vrot.lane.b32.xlu0 %v329, 8
      %v696 = vpop.permute.xlu0 %695
      %697 = vrot.lane.b32.xlu0 %v330, 8
      %v698 = vpop.permute.xlu0 %697
      %699 = vrot.lane.b32.xlu0 %v331, 8
      %v700 = vpop.permute.xlu0 %699
      %701 = vrot.lane.b32.xlu0 %v332, 8
      %v702 = vpop.permute.xlu0 %701
      %703 = vrot.lane.b32.xlu0 %v333, 8
      %v704 = vpop.permute.xlu0 %703
      %705 = vrot.lane.b32.xlu0 %v334, 8
      %v706 = vpop.permute.xlu0 %705
      %707 = vrot.lane.b32.xlu0 %v335, 8
      %v708 = vpop.permute.xlu0 %707
      %709 = vrot.lane.b32.xlu0 %v336, 8
      %v710 = vpop.permute.xlu0 %709
      %711 = vrot.lane.b32.xlu0 %v337, 8
      %v712 = vpop.permute.xlu0 %711
      %713 = vrot.lane.b32.xlu0 %v338, 8
      %v714 = vpop.permute.xlu0 %713
      %715 = vrot.lane.b32.xlu0 %v339, 8
      %v716 = vpop.permute.xlu0 %715
      %vm765 = vcmask 97346
      %766 = vst.msk [vmem:[#allocation3 - $0x2] sm:$0xfc] %vm765, %v622
      %vm767 = vcmask 97344
      %768 = vst.msk [vmem:[#allocation3 + $0x6] sm:$0xff] %vm767, %v624
      %vm769 = vcmask 91200
      %770 = vst.msk [vmem:[#allocation3 + $0xe] sm:$0x3] %vm769, %v626
      %771 = vst.msk [vmem:[#allocation3 + $0xe] sm:$0xfc] %vm765, %v628
      %772 = vst.msk [vmem:[#allocation3 + $0x16] sm:$0xff] %vm767, %v630
      %773 = vst.msk [vmem:[#allocation3 + $0x1e] sm:$0x3] %vm769, %v632
      %774 = vst.msk [vmem:[#allocation3 + $0x1e] sm:$0xfc] %vm765, %v634
      %775 = vst.msk [vmem:[#allocation3 + $0x26] sm:$0xff] %vm767, %v636
      %776 = vst.msk [vmem:[#allocation3 + $0x2e] sm:$0x3] %vm769, %v638
      %777 = vst.msk [vmem:[#allocation3 + $0x2e] sm:$0xfc] %vm765, %v640
      %778 = vst.msk [vmem:[#allocation3 + $0x36] sm:$0xff] %vm767, %v642
      %779 = vst.msk [vmem:[#allocation3 + $0x3e] sm:$0x3] %vm769, %v644
      %780 = vst.msk [vmem:[#allocation3 + $0x3e] sm:$0xfc] %vm765, %v646
      %781 = vst.msk [vmem:[#allocation3 + $0x46] sm:$0xff] %vm767, %v648
      %782 = vst.msk [vmem:[#allocation3 + $0x4e] sm:$0x3] %vm769, %v650
      %783 = vst.msk [vmem:[#allocation3 + $0x4e] sm:$0xfc] %vm765, %v652
      %784 = vst.msk [vmem:[#allocation3 + $0x56] sm:$0xff] %vm767, %v654
      %785 = vst.msk [vmem:[#allocation3 + $0x5e] sm:$0x3] %vm769, %v656
      %786 = vst.msk [vmem:[#allocation3 + $0x5e] sm:$0xfc] %vm765, %v658
      %787 = vst.msk [vmem:[#allocation3 + $0x66] sm:$0xff] %vm767, %v660
      %788 = vst.msk [vmem:[#allocation3 + $0x6e] sm:$0x3] %vm769, %v662
      %789 = vst.msk [vmem:[#allocation3 + $0x6e] sm:$0xfc] %vm765, %v664
      %790 = vst.msk [vmem:[#allocation3 + $0x76] sm:$0xff] %vm767, %v666
      %791 = vst.msk [vmem:[#allocation3 + $0x7e] sm:$0x3] %vm769, %v668
      %792 = vst.msk [vmem:[#allocation3 + $0x7e] sm:$0xfc] %vm765, %v670
      %793 = vst.msk [vmem:[#allocation3 + $0x86] sm:$0xff] %vm767, %v672
      %794 = vst.msk [vmem:[#allocation3 + $0x8e] sm:$0x3] %vm769, %v674
      %795 = vst.msk [vmem:[#allocation3 + $0x8e] sm:$0xfc] %vm765, %v676
      %796 = vst.msk [vmem:[#allocation3 + $0x96] sm:$0xff] %vm767, %v678
      %797 = vst.msk [vmem:[#allocation3 + $0x9e] sm:$0x3] %vm769, %v680
      %798 = vst.msk [vmem:[#allocation3 + $0x9e] sm:$0xfc] %vm765, %v682
      %799 = vst.msk [vmem:[#allocation3 + $0xa6] sm:$0xff] %vm767, %v684
      %800 = vst.msk [vmem:[#allocation3 + $0xae] sm:$0x3] %vm769, %v686
      %801 = vst.msk [vmem:[#allocation3 + $0xae] sm:$0xfc] %vm765, %v688
      %802 = vst.msk [vmem:[#allocation3 + $0xb6] sm:$0xff] %vm767, %v690
      %803 = vst.msk [vmem:[#allocation3 + $0xbe] sm:$0x3] %vm769, %v692
      %804 = vst.msk [vmem:[#allocation3 + $0xbe] sm:$0xfc] %vm765, %v694
      %805 = vst.msk [vmem:[#allocation3 + $0xc6] sm:$0xff] %vm767, %v696
      %806 = vst.msk [vmem:[#allocation3 + $0xce] sm:$0x3] %vm769, %v698
      %807 = vst.msk [vmem:[#allocation3 + $0xce] sm:$0xfc] %vm765, %v700
      %808 = vst.msk [vmem:[#allocation3 + $0xd6] sm:$0xff] %vm767, %v702
      %809 = vst.msk [vmem:[#allocation3 + $0xde] sm:$0x3] %vm769, %v704
      %810 = vst.msk [vmem:[#allocation3 + $0xde] sm:$0xfc] %vm765, %v706
      %811 = vst.msk [vmem:[#allocation3 + $0xe6] sm:$0xff] %vm767, %v708
      %812 = vst.msk [vmem:[#allocation3 + $0xee] sm:$0x3] %vm769, %v710
      %813 = vst.msk [vmem:[#allocation3 + $0xee] sm:$0xfc] %vm765, %v712
      %814 = vst.msk [vmem:[#allocation3 + $0xf6] sm:$0xff] %vm767, %v714
      %815 = vst.msk [vmem:[#allocation3 + $0xfe] sm:$0x3] %vm769, %v716
      %818 = vrot.lane.b32.xlu0 %v295, 12
      %v819 = vpop.permute.xlu0 %818
      %820 = vrot.lane.b32.xlu0 %v296, 12
      %v821 = vpop.permute.xlu0 %820
      %822 = vrot.lane.b32.xlu0 %v298, 12
      %v823 = vpop.permute.xlu0 %822
      %824 = vrot.lane.b32.xlu0 %v299, 12
      %v825 = vpop.permute.xlu0 %824
      %826 = vrot.lane.b32.xlu0 %v301, 12
      %v827 = vpop.permute.xlu0 %826
      %828 = vrot.lane.b32.xlu0 %v302, 12
      %v829 = vpop.permute.xlu0 %828
      %830 = vrot.lane.b32.xlu0 %v304, 12
      %v831 = vpop.permute.xlu0 %830
      %832 = vrot.lane.b32.xlu0 %v305, 12
      %v833 = vpop.permute.xlu0 %832
      %834 = vrot.lane.b32.xlu0 %v307, 12
      %v835 = vpop.permute.xlu0 %834
      %836 = vrot.lane.b32.xlu0 %v308, 12
      %v837 = vpop.permute.xlu0 %836
      %838 = vrot.lane.b32.xlu0 %v310, 12
      %v839 = vpop.permute.xlu0 %838
      %840 = vrot.lane.b32.xlu0 %v311, 12
      %v841 = vpop.permute.xlu0 %840
      %842 = vrot.lane.b32.xlu0 %v313, 12
      %v843 = vpop.permute.xlu0 %842
      %844 = vrot.lane.b32.xlu0 %v314, 12
      %v845 = vpop.permute.xlu0 %844
      %846 = vrot.lane.b32.xlu0 %v316, 12
      %v847 = vpop.permute.xlu0 %846
      %848 = vrot.lane.b32.xlu0 %v317, 12
      %v849 = vpop.permute.xlu0 %848
      %850 = vrot.lane.b32.xlu0 %v319, 12
      %v851 = vpop.permute.xlu0 %850
      %852 = vrot.lane.b32.xlu0 %v320, 12
      %v853 = vpop.permute.xlu0 %852
      %854 = vrot.lane.b32.xlu0 %v322, 12
      %v855 = vpop.permute.xlu0 %854
      %856 = vrot.lane.b32.xlu0 %v323, 12
      %v857 = vpop.permute.xlu0 %856
      %858 = vrot.lane.b32.xlu0 %v325, 12
      %v859 = vpop.permute.xlu0 %858
      %860 = vrot.lane.b32.xlu0 %v326, 12
      %v861 = vpop.permute.xlu0 %860
      %862 = vrot.lane.b32.xlu0 %v328, 12
      %v863 = vpop.permute.xlu0 %862
      %864 = vrot.lane.b32.xlu0 %v329, 12
      %v865 = vpop.permute.xlu0 %864
      %866 = vrot.lane.b32.xlu0 %v331, 12
      %v867 = vpop.permute.xlu0 %866
      %868 = vrot.lane.b32.xlu0 %v332, 12
      %v869 = vpop.permute.xlu0 %868
      %870 = vrot.lane.b32.xlu0 %v334, 12
      %v871 = vpop.permute.xlu0 %870
      %872 = vrot.lane.b32.xlu0 %v335, 12
      %v873 = vpop.permute.xlu0 %872
      %874 = vrot.lane.b32.xlu0 %v337, 12
      %v875 = vpop.permute.xlu0 %874
      %876 = vrot.lane.b32.xlu0 %v338, 12
      %v877 = vpop.permute.xlu0 %876
      %878 = vrot.lane.b32.xlu0 %v340, 12
      %v879 = vpop.permute.xlu0 %878
      %880 = vrot.lane.b32.xlu0 %v341, 12
      %v881 = vpop.permute.xlu0 %880
      %vm914 = vcmask 130144
      %915 = vst.msk [vmem:[#allocation3] sm:$0xff] %vm914, %v819
      %916 = vst.msk [vmem:[#allocation3 + $0x8] sm:$0xff] %vm914, %v821
      %917 = vst.msk [vmem:[#allocation3 + $0x10] sm:$0xff] %vm914, %v823
      %918 = vst.msk [vmem:[#allocation3 + $0x18] sm:$0xff] %vm914, %v825
      %919 = vst.msk [vmem:[#allocation3 + $0x20] sm:$0xff] %vm914, %v827
      %920 = vst.msk [vmem:[#allocation3 + $0x28] sm:$0xff] %vm914, %v829
      %921 = vst.msk [vmem:[#allocation3 + $0x30] sm:$0xff] %vm914, %v831
      %922 = vst.msk [vmem:[#allocation3 + $0x38] sm:$0xff] %vm914, %v833
      %923 = vst.msk [vmem:[#allocation3 + $0x40] sm:$0xff] %vm914, %v835
      %924 = vst.msk [vmem:[#allocation3 + $0x48] sm:$0xff] %vm914, %v837
      %925 = vst.msk [vmem:[#allocation3 + $0x50] sm:$0xff] %vm914, %v839
      %926 = vst.msk [vmem:[#allocation3 + $0x58] sm:$0xff] %vm914, %v841
      %927 = vst.msk [vmem:[#allocation3 + $0x60] sm:$0xff] %vm914, %v843
      %928 = vst.msk [vmem:[#allocation3 + $0x68] sm:$0xff] %vm914, %v845
      %929 = vst.msk [vmem:[#allocation3 + $0x70] sm:$0xff] %vm914, %v847
      %930 = vst.msk [vmem:[#allocation3 + $0x78] sm:$0xff] %vm914, %v849
      %931 = vst.msk [vmem:[#allocation3 + $0x80] sm:$0xff] %vm914, %v851
      %932 = vst.msk [vmem:[#allocation3 + $0x88] sm:$0xff] %vm914, %v853
      %933 = vst.msk [vmem:[#allocation3 + $0x90] sm:$0xff] %vm914, %v855
      %934 = vst.msk [vmem:[#allocation3 + $0x98] sm:$0xff] %vm914, %v857
      %935 = vst.msk [vmem:[#allocation3 + $0xa0] sm:$0xff] %vm914, %v859
      %936 = vst.msk [vmem:[#allocation3 + $0xa8] sm:$0xff] %vm914, %v861
      %937 = vst.msk [vmem:[#allocation3 + $0xb0] sm:$0xff] %vm914, %v863
      %938 = vst.msk [vmem:[#allocation3 + $0xb8] sm:$0xff] %vm914, %v865
      %939 = vst.msk [vmem:[#allocation3 + $0xc0] sm:$0xff] %vm914, %v867
      %940 = vst.msk [vmem:[#allocation3 + $0xc8] sm:$0xff] %vm914, %v869
      %941 = vst.msk [vmem:[#allocation3 + $0xd0] sm:$0xff] %vm914, %v871
      %942 = vst.msk [vmem:[#allocation3 + $0xd8] sm:$0xff] %vm914, %v873
      %943 = vst.msk [vmem:[#allocation3 + $0xe0] sm:$0xff] %vm914, %v875
      %944 = vst.msk [vmem:[#allocation3 + $0xe8] sm:$0xff] %vm914, %v877
      %945 = vst.msk [vmem:[#allocation3 + $0xf0] sm:$0xff] %vm914, %v879
      %946 = vst.msk [vmem:[#allocation3 + $0xf8] sm:$0xff] %vm914, %v881
      %948 = vrot.lane.b32.xlu0 %v295, 16
      %v949 = vpop.permute.xlu0 %948
      %950 = vrot.lane.b32.xlu0 %v296, 16
      %v951 = vpop.permute.xlu0 %950
      %952 = vrot.lane.b32.xlu0 %v297, 16
      %v953 = vpop.permute.xlu0 %952
      %954 = vrot.lane.b32.xlu0 %v298, 16
      %v955 = vpop.permute.xlu0 %954
      %956 = vrot.lane.b32.xlu0 %v299, 16
      %v957 = vpop.permute.xlu0 %956
      %958 = vrot.lane.b32.xlu0 %v300, 16
      %v959 = vpop.permute.xlu0 %958
      %960 = vrot.lane.b32.xlu0 %v301, 16
      %v961 = vpop.permute.xlu0 %960
      %962 = vrot.lane.b32.xlu0 %v302, 16
      %v963 = vpop.permute.xlu0 %962
      %964 = vrot.lane.b32.xlu0 %v303, 16
      %v965 = vpop.permute.xlu0 %964
      %966 = vrot.lane.b32.xlu0 %v304, 16
      %v967 = vpop.permute.xlu0 %966
      %968 = vrot.lane.b32.xlu0 %v305, 16
      %v969 = vpop.permute.xlu0 %968
      %970 = vrot.lane.b32.xlu0 %v306, 16
      %v971 = vpop.permute.xlu0 %970
      %972 = vrot.lane.b32.xlu0 %v307, 16
      %v973 = vpop.permute.xlu0 %972
      %974 = vrot.lane.b32.xlu0 %v308, 16
      %v975 = vpop.permute.xlu0 %974
      %976 = vrot.lane.b32.xlu0 %v309, 16
      %v977 = vpop.permute.xlu0 %976
      %978 = vrot.lane.b32.xlu0 %v310, 16
      %v979 = vpop.permute.xlu0 %978
      %980 = vrot.lane.b32.xlu0 %v311, 16
      %v981 = vpop.permute.xlu0 %980
      %982 = vrot.lane.b32.xlu0 %v312, 16
      %v983 = vpop.permute.xlu0 %982
      %984 = vrot.lane.b32.xlu0 %v313, 16
      %v985 = vpop.permute.xlu0 %984
      %986 = vrot.lane.b32.xlu0 %v314, 16
      %v987 = vpop.permute.xlu0 %986
      %988 = vrot.lane.b32.xlu0 %v315, 16
      %v989 = vpop.permute.xlu0 %988
      %990 = vrot.lane.b32.xlu0 %v316, 16
      %v991 = vpop.permute.xlu0 %990
      %992 = vrot.lane.b32.xlu0 %v317, 16
      %v993 = vpop.permute.xlu0 %992
      %994 = vrot.lane.b32.xlu0 %v318, 16
      %v995 = vpop.permute.xlu0 %994
      %996 = vrot.lane.b32.xlu0 %v319, 16
      %v997 = vpop.permute.xlu0 %996
      %998 = vrot.lane.b32.xlu0 %v320, 16
      %v999 = vpop.permute.xlu0 %998
      %1000 = vrot.lane.b32.xlu0 %v321, 16
      %v1001 = vpop.permute.xlu0 %1000
      %1002 = vrot.lane.b32.xlu0 %v322, 16
      %v1003 = vpop.permute.xlu0 %1002
      %1004 = vrot.lane.b32.xlu0 %v323, 16
      %v1005 = vpop.permute.xlu0 %1004
      %1006 = vrot.lane.b32.xlu0 %v324, 16
      %v1007 = vpop.permute.xlu0 %1006
      %1008 = vrot.lane.b32.xlu0 %v325, 16
      %v1009 = vpop.permute.xlu0 %1008
      %1010 = vrot.lane.b32.xlu0 %v326, 16
      %v1011 = vpop.permute.xlu0 %1010
      %1012 = vrot.lane.b32.xlu0 %v327, 16
      %v1013 = vpop.permute.xlu0 %1012
      %1014 = vrot.lane.b32.xlu0 %v328, 16
      %v1015 = vpop.permute.xlu0 %1014
      %1016 = vrot.lane.b32.xlu0 %v329, 16
      %v1017 = vpop.permute.xlu0 %1016
      %1018 = vrot.lane.b32.xlu0 %v330, 16
      %v1019 = vpop.permute.xlu0 %1018
      %1020 = vrot.lane.b32.xlu0 %v331, 16
      %v1021 = vpop.permute.xlu0 %1020
      %1022 = vrot.lane.b32.xlu0 %v332, 16
      %v1023 = vpop.permute.xlu0 %1022
      %1024 = vrot.lane.b32.xlu0 %v333, 16
      %v1025 = vpop.permute.xlu0 %1024
      %1026 = vrot.lane.b32.xlu0 %v334, 16
      %v1027 = vpop.permute.xlu0 %1026
      %1028 = vrot.lane.b32.xlu0 %v335, 16
      %v1029 = vpop.permute.xlu0 %1028
      %1030 = vrot.lane.b32.xlu0 %v336, 16
      %v1031 = vpop.permute.xlu0 %1030
      %1032 = vrot.lane.b32.xlu0 %v337, 16
      %v1033 = vpop.permute.xlu0 %1032
      %1034 = vrot.lane.b32.xlu0 %v338, 16
      %v1035 = vpop.permute.xlu0 %1034
      %1036 = vrot.lane.b32.xlu0 %v339, 16
      %v1037 = vpop.permute.xlu0 %1036
      %1038 = vrot.lane.b32.xlu0 %v340, 16
      %v1039 = vpop.permute.xlu0 %1038
      %1040 = vrot.lane.b32.xlu0 %v341, 16
      %v1041 = vpop.permute.xlu0 %1040
      %1042 = vrot.lane.b32.xlu0 %v342, 16
      %v1043 = vpop.permute.xlu0 %1042
      %vm1092 = vcmask 162945
      %1093 = vst.msk [vmem:[#allocation3 - $0x1] sm:$0xfe] %vm1092, %v949
      %vm1094 = vcmask 162944
      %1095 = vst.msk [vmem:[#allocation3 + $0x7] sm:$0xff] %vm1094, %v951
      %vm1096 = vcmask 155776
      %1097 = vst.msk [vmem:[#allocation3 + $0xf] sm:$0x1] %vm1096, %v953
      %1098 = vst.msk [vmem:[#allocation3 + $0xf] sm:$0xfe] %vm1092, %v955
      %1099 = vst.msk [vmem:[#allocation3 + $0x17] sm:$0xff] %vm1094, %v957
      %1100 = vst.msk [vmem:[#allocation3 + $0x1f] sm:$0x1] %vm1096, %v959
      %1101 = vst.msk [vmem:[#allocation3 + $0x1f] sm:$0xfe] %vm1092, %v961
      %1102 = vst.msk [vmem:[#allocation3 + $0x27] sm:$0xff] %vm1094, %v963
      %1103 = vst.msk [vmem:[#allocation3 + $0x2f] sm:$0x1] %vm1096, %v965
      %1104 = vst.msk [vmem:[#allocation3 + $0x2f] sm:$0xfe] %vm1092, %v967
      %1105 = vst.msk [vmem:[#allocation3 + $0x37] sm:$0xff] %vm1094, %v969
      %1106 = vst.msk [vmem:[#allocation3 + $0x3f] sm:$0x1] %vm1096, %v971
      %1107 = vst.msk [vmem:[#allocation3 + $0x3f] sm:$0xfe] %vm1092, %v973
      %1108 = vst.msk [vmem:[#allocation3 + $0x47] sm:$0xff] %vm1094, %v975
      %1109 = vst.msk [vmem:[#allocation3 + $0x4f] sm:$0x1] %vm1096, %v977
      %1110 = vst.msk [vmem:[#allocation3 + $0x4f] sm:$0xfe] %vm1092, %v979
      %1111 = vst.msk [vmem:[#allocation3 + $0x57] sm:$0xff] %vm1094, %v981
      %1112 = vst.msk [vmem:[#allocation3 + $0x5f] sm:$0x1] %vm1096, %v983
      %1113 = vst.msk [vmem:[#allocation3 + $0x5f] sm:$0xfe] %vm1092, %v985
      %1114 = vst.msk [vmem:[#allocation3 + $0x67] sm:$0xff] %vm1094, %v987
      %1115 = vst.msk [vmem:[#allocation3 + $0x6f] sm:$0x1] %vm1096, %v989
      %1116 = vst.msk [vmem:[#allocation3 + $0x6f] sm:$0xfe] %vm1092, %v991
      %1117 = vst.msk [vmem:[#allocation3 + $0x77] sm:$0xff] %vm1094, %v993
      %1118 = vst.msk [vmem:[#allocation3 + $0x7f] sm:$0x1] %vm1096, %v995
      %1119 = vst.msk [vmem:[#allocation3 + $0x7f] sm:$0xfe] %vm1092, %v997
      %1120 = vst.msk [vmem:[#allocation3 + $0x87] sm:$0xff] %vm1094, %v999
      %1121 = vst.msk [vmem:[#allocation3 + $0x8f] sm:$0x1] %vm1096, %v1001
      %1122 = vst.msk [vmem:[#allocation3 + $0x8f] sm:$0xfe] %vm1092, %v1003
      %1123 = vst.msk [vmem:[#allocation3 + $0x97] sm:$0xff] %vm1094, %v1005
      %1124 = vst.msk [vmem:[#allocation3 + $0x9f] sm:$0x1] %vm1096, %v1007
      %1125 = vst.msk [vmem:[#allocation3 + $0x9f] sm:$0xfe] %vm1092, %v1009
      %1126 = vst.msk [vmem:[#allocation3 + $0xa7] sm:$0xff] %vm1094, %v1011
      %1127 = vst.msk [vmem:[#allocation3 + $0xaf] sm:$0x1] %vm1096, %v1013
      %1128 = vst.msk [vmem:[#allocation3 + $0xaf] sm:$0xfe] %vm1092, %v1015
      %1129 = vst.msk [vmem:[#allocation3 + $0xb7] sm:$0xff] %vm1094, %v1017
      %1130 = vst.msk [vmem:[#allocation3 + $0xbf] sm:$0x1] %vm1096, %v1019
      %1131 = vst.msk [vmem:[#allocation3 + $0xbf] sm:$0xfe] %vm1092, %v1021
      %1132 = vst.msk [vmem:[#allocation3 + $0xc7] sm:$0xff] %vm1094, %v1023
      %1133 = vst.msk [vmem:[#allocation3 + $0xcf] sm:$0x1] %vm1096, %v1025
      %1134 = vst.msk [vmem:[#allocation3 + $0xcf] sm:$0xfe] %vm1092, %v1027
      %1135 = vst.msk [vmem:[#allocation3 + $0xd7] sm:$0xff] %vm1094, %v1029
      %1136 = vst.msk [vmem:[#allocation3 + $0xdf] sm:$0x1] %vm1096, %v1031
      %1137 = vst.msk [vmem:[#allocation3 + $0xdf] sm:$0xfe] %vm1092, %v1033
      %1138 = vst.msk [vmem:[#allocation3 + $0xe7] sm:$0xff] %vm1094, %v1035
      %1139 = vst.msk [vmem:[#allocation3 + $0xef] sm:$0x1] %vm1096, %v1037
      %1140 = vst.msk [vmem:[#allocation3 + $0xef] sm:$0xfe] %vm1092, %v1039
      %1141 = vst.msk [vmem:[#allocation3 + $0xf7] sm:$0xff] %vm1094, %v1041
      %1142 = vst.msk [vmem:[#allocation3 + $0xff] sm:$0x1] %vm1096, %v1043
      %1143 = vrot.lane.b32.xlu0 %v295, 20
      %v1144 = vpop.permute.xlu0 %1143
      %1145 = vrot.lane.b32.xlu0 %v296, 20
      %v1146 = vpop.permute.xlu0 %1145
      %1147 = vrot.lane.b32.xlu0 %v297, 20
      %v1148 = vpop.permute.xlu0 %1147
      %1149 = vrot.lane.b32.xlu0 %v298, 20
      %v1150 = vpop.permute.xlu0 %1149
      %1151 = vrot.lane.b32.xlu0 %v299, 20
      %v1152 = vpop.permute.xlu0 %1151
      %1153 = vrot.lane.b32.xlu0 %v300, 20
      %v1154 = vpop.permute.xlu0 %1153
      %1155 = vrot.lane.b32.xlu0 %v301, 20
      %v1156 = vpop.permute.xlu0 %1155
      %1157 = vrot.lane.b32.xlu0 %v302, 20
      %v1158 = vpop.permute.xlu0 %1157
      %1159 = vrot.lane.b32.xlu0 %v303, 20
      %v1160 = vpop.permute.xlu0 %1159
      %1161 = vrot.lane.b32.xlu0 %v304, 20
      %v1162 = vpop.permute.xlu0 %1161
      %1163 = vrot.lane.b32.xlu0 %v305, 20
      %v1164 = vpop.permute.xlu0 %1163
      %1165 = vrot.lane.b32.xlu0 %v306, 20
      %v1166 = vpop.permute.xlu0 %1165
      %1167 = vrot.lane.b32.xlu0 %v307, 20
      %v1168 = vpop.permute.xlu0 %1167
      %1169 = vrot.lane.b32.xlu0 %v308, 20
      %v1170 = vpop.permute.xlu0 %1169
      %1171 = vrot.lane.b32.xlu0 %v309, 20
      %v1172 = vpop.permute.xlu0 %1171
      %1173 = vrot.lane.b32.xlu0 %v310, 20
      %v1174 = vpop.permute.xlu0 %1173
      %1175 = vrot.lane.b32.xlu0 %v311, 20
      %v1176 = vpop.permute.xlu0 %1175
      %1177 = vrot.lane.b32.xlu0 %v312, 20
      %v1178 = vpop.permute.xlu0 %1177
      %1179 = vrot.lane.b32.xlu0 %v313, 20
      %v1180 = vpop.permute.xlu0 %1179
      %1181 = vrot.lane.b32.xlu0 %v314, 20
      %v1182 = vpop.permute.xlu0 %1181
      %1183 = vrot.lane.b32.xlu0 %v315, 20
      %v1184 = vpop.permute.xlu0 %1183
      %1185 = vrot.lane.b32.xlu0 %v316, 20
      %v1186 = vpop.permute.xlu0 %1185
      %1187 = vrot.lane.b32.xlu0 %v317, 20
      %v1188 = vpop.permute.xlu0 %1187
      %1189 = vrot.lane.b32.xlu0 %v318, 20
      %v1190 = vpop.permute.xlu0 %1189
      %1191 = vrot.lane.b32.xlu0 %v319, 20
      %v1192 = vpop.permute.xlu0 %1191
      %1193 = vrot.lane.b32.xlu0 %v320, 20
      %v1194 = vpop.permute.xlu0 %1193
      %1195 = vrot.lane.b32.xlu0 %v321, 20
      %v1196 = vpop.permute.xlu0 %1195
      %1197 = vrot.lane.b32.xlu0 %v322, 20
      %v1198 = vpop.permute.xlu0 %1197
      %1199 = vrot.lane.b32.xlu0 %v323, 20
      %v1200 = vpop.permute.xlu0 %1199
      %1201 = vrot.lane.b32.xlu0 %v324, 20
      %v1202 = vpop.permute.xlu0 %1201
      %1203 = vrot.lane.b32.xlu0 %v325, 20
      %v1204 = vpop.permute.xlu0 %1203
      %1205 = vrot.lane.b32.xlu0 %v326, 20
      %v1206 = vpop.permute.xlu0 %1205
      %1207 = vrot.lane.b32.xlu0 %v327, 20
      %v1208 = vpop.permute.xlu0 %1207
      %1209 = vrot.lane.b32.xlu0 %v328, 20
      %v1210 = vpop.permute.xlu0 %1209
      %1211 = vrot.lane.b32.xlu0 %v329, 20
      %v1212 = vpop.permute.xlu0 %1211
      %1213 = vrot.lane.b32.xlu0 %v330, 20
      %v1214 = vpop.permute.xlu0 %1213
      %1215 = vrot.lane.b32.xlu0 %v331, 20
      %v1216 = vpop.permute.xlu0 %1215
      %1217 = vrot.lane.b32.xlu0 %v332, 20
      %v1218 = vpop.permute.xlu0 %1217
      %1219 = vrot.lane.b32.xlu0 %v333, 20
      %v1220 = vpop.permute.xlu0 %1219
      %1221 = vrot.lane.b32.xlu0 %v334, 20
      %v1222 = vpop.permute.xlu0 %1221
      %1223 = vrot.lane.b32.xlu0 %v335, 20
      %v1224 = vpop.permute.xlu0 %1223
      %1225 = vrot.lane.b32.xlu0 %v336, 20
      %v1226 = vpop.permute.xlu0 %1225
      %1227 = vrot.lane.b32.xlu0 %v337, 20
      %v1228 = vpop.permute.xlu0 %1227
      %1229 = vrot.lane.b32.xlu0 %v338, 20
      %v1230 = vpop.permute.xlu0 %1229
      %1231 = vrot.lane.b32.xlu0 %v339, 20
      %v1232 = vpop.permute.xlu0 %1231
      %1233 = vrot.lane.b32.xlu0 %v340, 20
      %v1234 = vpop.permute.xlu0 %1233
      %1235 = vrot.lane.b32.xlu0 %v341, 20
      %v1236 = vpop.permute.xlu0 %1235
      %1237 = vrot.lane.b32.xlu0 %v342, 20
      %v1238 = vpop.permute.xlu0 %1237
      %vm1287 = vcmask 195746
      %1288 = vst.msk [vmem:[#allocation3 - $0x2] sm:$0xfc] %vm1287, %v1144
      %vm1289 = vcmask 195744
      %1290 = vst.msk [vmem:[#allocation3 + $0x6] sm:$0xff] %vm1289, %v1146
      %vm1291 = vcmask 189600
      %1292 = vst.msk [vmem:[#allocation3 + $0xe] sm:$0x3] %vm1291, %v1148
      %1293 = vst.msk [vmem:[#allocation3 + $0xe] sm:$0xfc] %vm1287, %v1150
      %1294 = vst.msk [vmem:[#allocation3 + $0x16] sm:$0xff] %vm1289, %v1152
      %1295 = vst.msk [vmem:[#allocation3 + $0x1e] sm:$0x3] %vm1291, %v1154
      %1296 = vst.msk [vmem:[#allocation3 + $0x1e] sm:$0xfc] %vm1287, %v1156
      %1297 = vst.msk [vmem:[#allocation3 + $0x26] sm:$0xff] %vm1289, %v1158
      %1298 = vst.msk [vmem:[#allocation3 + $0x2e] sm:$0x3] %vm1291, %v1160
      %1299 = vst.msk [vmem:[#allocation3 + $0x2e] sm:$0xfc] %vm1287, %v1162
      %1300 = vst.msk [vmem:[#allocation3 + $0x36] sm:$0xff] %vm1289, %v1164
      %1301 = vst.msk [vmem:[#allocation3 + $0x3e] sm:$0x3] %vm1291, %v1166
      %1302 = vst.msk [vmem:[#allocation3 + $0x3e] sm:$0xfc] %vm1287, %v1168
      %1303 = vst.msk [vmem:[#allocation3 + $0x46] sm:$0xff] %vm1289, %v1170
      %1304 = vst.msk [vmem:[#allocation3 + $0x4e] sm:$0x3] %vm1291, %v1172
      %1305 = vst.msk [vmem:[#allocation3 + $0x4e] sm:$0xfc] %vm1287, %v1174
      %1306 = vst.msk [vmem:[#allocation3 + $0x56] sm:$0xff] %vm1289, %v1176
      %1307 = vst.msk [vmem:[#allocation3 + $0x5e] sm:$0x3] %vm1291, %v1178
      %1308 = vst.msk [vmem:[#allocation3 + $0x5e] sm:$0xfc] %vm1287, %v1180
      %1309 = vst.msk [vmem:[#allocation3 + $0x66] sm:$0xff] %vm1289, %v1182
      %1310 = vst.msk [vmem:[#allocation3 + $0x6e] sm:$0x3] %vm1291, %v1184
      %1311 = vst.msk [vmem:[#allocation3 + $0x6e] sm:$0xfc] %vm1287, %v1186
      %1312 = vst.msk [vmem:[#allocation3 + $0x76] sm:$0xff] %vm1289, %v1188
      %1313 = vst.msk [vmem:[#allocation3 + $0x7e] sm:$0x3] %vm1291, %v1190
      %1314 = vst.msk [vmem:[#allocation3 + $0x7e] sm:$0xfc] %vm1287, %v1192
      %1315 = vst.msk [vmem:[#allocation3 + $0x86] sm:$0xff] %vm1289, %v1194
      %1316 = vst.msk [vmem:[#allocation3 + $0x8e] sm:$0x3] %vm1291, %v1196
      %1317 = vst.msk [vmem:[#allocation3 + $0x8e] sm:$0xfc] %vm1287, %v1198
      %1318 = vst.msk [vmem:[#allocation3 + $0x96] sm:$0xff] %vm1289, %v1200
      %1319 = vst.msk [vmem:[#allocation3 + $0x9e] sm:$0x3] %vm1291, %v1202
      %1320 = vst.msk [vmem:[#allocation3 + $0x9e] sm:$0xfc] %vm1287, %v1204
      %1321 = vst.msk [vmem:[#allocation3 + $0xa6] sm:$0xff] %vm1289, %v1206
      %1322 = vst.msk [vmem:[#allocation3 + $0xae] sm:$0x3] %vm1291, %v1208
      %1323 = vst.msk [vmem:[#allocation3 + $0xae] sm:$0xfc] %vm1287, %v1210
      %1324 = vst.msk [vmem:[#allocation3 + $0xb6] sm:$0xff] %vm1289, %v1212
      %1325 = vst.msk [vmem:[#allocation3 + $0xbe] sm:$0x3] %vm1291, %v1214
      %1326 = vst.msk [vmem:[#allocation3 + $0xbe] sm:$0xfc] %vm1287, %v1216
      %1327 = vst.msk [vmem:[#allocation3 + $0xc6] sm:$0xff] %vm1289, %v1218
      %1328 = vst.msk [vmem:[#allocation3 + $0xce] sm:$0x3] %vm1291, %v1220
      %1329 = vst.msk [vmem:[#allocation3 + $0xce] sm:$0xfc] %vm1287, %v1222
      %1330 = vst.msk [vmem:[#allocation3 + $0xd6] sm:$0xff] %vm1289, %v1224
      %1331 = vst.msk [vmem:[#allocation3 + $0xde] sm:$0x3] %vm1291, %v1226
      %1332 = vst.msk [vmem:[#allocation3 + $0xde] sm:$0xfc] %vm1287, %v1228
      %1333 = vst.msk [vmem:[#allocation3 + $0xe6] sm:$0xff] %vm1289, %v1230
      %1334 = vst.msk [vmem:[#allocation3 + $0xee] sm:$0x3] %vm1291, %v1232
      %1335 = vst.msk [vmem:[#allocation3 + $0xee] sm:$0xfc] %vm1287, %v1234
      %1336 = vst.msk [vmem:[#allocation3 + $0xf6] sm:$0xff] %vm1289, %v1236
      %1337 = vst.msk [vmem:[#allocation3 + $0xfe] sm:$0x3] %vm1291, %v1238
      %1340 = vrot.lane.b32.xlu0 %v298, 24
      %v1341 = vpop.permute.xlu0 %1340
      %1342 = vrot.lane.b32.xlu0 %v299, 24
      %v1343 = vpop.permute.xlu0 %1342
      %1344 = vrot.lane.b32.xlu0 %v301, 24
      %v1345 = vpop.permute.xlu0 %1344
      %1346 = vrot.lane.b32.xlu0 %v302, 24
      %v1347 = vpop.permute.xlu0 %1346
      %1348 = vrot.lane.b32.xlu0 %v304, 24
      %v1349 = vpop.permute.xlu0 %1348
      %1350 = vrot.lane.b32.xlu0 %v305, 24
      %v1351 = vpop.permute.xlu0 %1350
      %1352 = vrot.lane.b32.xlu0 %v307, 24
      %v1353 = vpop.permute.xlu0 %1352
      %1354 = vrot.lane.b32.xlu0 %v308, 24
      %v1355 = vpop.permute.xlu0 %1354
      %1356 = vrot.lane.b32.xlu0 %v310, 24
      %v1357 = vpop.permute.xlu0 %1356
      %1358 = vrot.lane.b32.xlu0 %v311, 24
      %v1359 = vpop.permute.xlu0 %1358
      %1360 = vrot.lane.b32.xlu0 %v313, 24
      %v1361 = vpop.permute.xlu0 %1360
      %1362 = vrot.lane.b32.xlu0 %v314, 24
      %v1363 = vpop.permute.xlu0 %1362
      %1364 = vrot.lane.b32.xlu0 %v316, 24
      %v1365 = vpop.permute.xlu0 %1364
      %1366 = vrot.lane.b32.xlu0 %v317, 24
      %v1367 = vpop.permute.xlu0 %1366
      %1368 = vrot.lane.b32.xlu0 %v319, 24
      %v1369 = vpop.permute.xlu0 %1368
      %1370 = vrot.lane.b32.xlu0 %v320, 24
      %v1371 = vpop.permute.xlu0 %1370
      %1372 = vrot.lane.b32.xlu0 %v322, 24
      %v1373 = vpop.permute.xlu0 %1372
      %1374 = vrot.lane.b32.xlu0 %v323, 24
      %v1375 = vpop.permute.xlu0 %1374
      %1376 = vrot.lane.b32.xlu0 %v325, 24
      %v1377 = vpop.permute.xlu0 %1376
      %1378 = vrot.lane.b32.xlu0 %v326, 24
      %v1379 = vpop.permute.xlu0 %1378
      %1380 = vrot.lane.b32.xlu0 %v328, 24
      %v1381 = vpop.permute.xlu0 %1380
      %1382 = vrot.lane.b32.xlu0 %v329, 24
      %v1383 = vpop.permute.xlu0 %1382
      %1384 = vrot.lane.b32.xlu0 %v331, 24
      %v1385 = vpop.permute.xlu0 %1384
      %1386 = vrot.lane.b32.xlu0 %v332, 24
      %v1387 = vpop.permute.xlu0 %1386
      %1388 = vrot.lane.b32.xlu0 %v334, 24
      %v1389 = vpop.permute.xlu0 %1388
      %1390 = vrot.lane.b32.xlu0 %v335, 24
      %v1391 = vpop.permute.xlu0 %1390
      %1392 = vrot.lane.b32.xlu0 %v337, 24
      %v1393 = vpop.permute.xlu0 %1392
      %1394 = vrot.lane.b32.xlu0 %v338, 24
      %v1395 = vpop.permute.xlu0 %1394
      %1396 = vrot.lane.b32.xlu0 %v340, 24
      %v1397 = vpop.permute.xlu0 %1396
      %1398 = vrot.lane.b32.xlu0 %v341, 24
      %v1399 = vpop.permute.xlu0 %1398
      %1400 = vrot.lane.b32.xlu0 %v343, 24
      %v1401 = vpop.permute.xlu0 %1400
      %1402 = vrot.lane.b32.xlu0 %v344, 24
      %v1403 = vpop.permute.xlu0 %1402
      %vm1436 = vcmask 228544
      %1437 = vst.msk [vmem:[#allocation3] sm:$0xff] %vm1436, %v1341
      %1438 = vst.msk [vmem:[#allocation3 + $0x8] sm:$0xff] %vm1436, %v1343
      %1439 = vst.msk [vmem:[#allocation3 + $0x10] sm:$0xff] %vm1436, %v1345
      %1440 = vst.msk [vmem:[#allocation3 + $0x18] sm:$0xff] %vm1436, %v1347
      %1441 = vst.msk [vmem:[#allocation3 + $0x20] sm:$0xff] %vm1436, %v1349
      %1442 = vst.msk [vmem:[#allocation3 + $0x28] sm:$0xff] %vm1436, %v1351
      %1443 = vst.msk [vmem:[#allocation3 + $0x30] sm:$0xff] %vm1436, %v1353
      %1444 = vst.msk [vmem:[#allocation3 + $0x38] sm:$0xff] %vm1436, %v1355
      %1445 = vst.msk [vmem:[#allocation3 + $0x40] sm:$0xff] %vm1436, %v1357
      %1446 = vst.msk [vmem:[#allocation3 + $0x48] sm:$0xff] %vm1436, %v1359
      %1447 = vst.msk [vmem:[#allocation3 + $0x50] sm:$0xff] %vm1436, %v1361
      %1448 = vst.msk [vmem:[#allocation3 + $0x58] sm:$0xff] %vm1436, %v1363
      %1449 = vst.msk [vmem:[#allocation3 + $0x60] sm:$0xff] %vm1436, %v1365
      %1450 = vst.msk [vmem:[#allocation3 + $0x68] sm:$0xff] %vm1436, %v1367
      %1451 = vst.msk [vmem:[#allocation3 + $0x70] sm:$0xff] %vm1436, %v1369
      %1452 = vst.msk [vmem:[#allocation3 + $0x78] sm:$0xff] %vm1436, %v1371
      %1453 = vst.msk [vmem:[#allocation3 + $0x80] sm:$0xff] %vm1436, %v1373
      %1454 = vst.msk [vmem:[#allocation3 + $0x88] sm:$0xff] %vm1436, %v1375
      %1455 = vst.msk [vmem:[#allocation3 + $0x90] sm:$0xff] %vm1436, %v1377
      %1456 = vst.msk [vmem:[#allocation3 + $0x98] sm:$0xff] %vm1436, %v1379
      %1457 = vst.msk [vmem:[#allocation3 + $0xa0] sm:$0xff] %vm1436, %v1381
      %1458 = vst.msk [vmem:[#allocation3 + $0xa8] sm:$0xff] %vm1436, %v1383
      %1459 = vst.msk [vmem:[#allocation3 + $0xb0] sm:$0xff] %vm1436, %v1385
      %1460 = vst.msk [vmem:[#allocation3 + $0xb8] sm:$0xff] %vm1436, %v1387
      %1461 = vst.msk [vmem:[#allocation3 + $0xc0] sm:$0xff] %vm1436, %v1389
      %1462 = vst.msk [vmem:[#allocation3 + $0xc8] sm:$0xff] %vm1436, %v1391
      %1463 = vst.msk [vmem:[#allocation3 + $0xd0] sm:$0xff] %vm1436, %v1393
      %1464 = vst.msk [vmem:[#allocation3 + $0xd8] sm:$0xff] %vm1436, %v1395
      %1465 = vst.msk [vmem:[#allocation3 + $0xe0] sm:$0xff] %vm1436, %v1397
      %1466 = vst.msk [vmem:[#allocation3 + $0xe8] sm:$0xff] %vm1436, %v1399
      %1467 = vst.msk [vmem:[#allocation3 + $0xf0] sm:$0xff] %vm1436, %v1401
      %1468 = vst.msk [vmem:[#allocation3 + $0xf8] sm:$0xff] %vm1436, %v1403
      %1470 = vrot.lane.b32.xlu0 %v298, 28
      %v1471 = vpop.permute.xlu0 %1470
      %1472 = vrot.lane.b32.xlu0 %v299, 28
      %v1473 = vpop.permute.xlu0 %1472
      %1474 = vrot.lane.b32.xlu0 %v300, 28
      %v1475 = vpop.permute.xlu0 %1474
      %1476 = vrot.lane.b32.xlu0 %v301, 28
      %v1477 = vpop.permute.xlu0 %1476
      %1478 = vrot.lane.b32.xlu0 %v302, 28
      %v1479 = vpop.permute.xlu0 %1478
      %1480 = vrot.lane.b32.xlu0 %v303, 28
      %v1481 = vpop.permute.xlu0 %1480
      %1482 = vrot.lane.b32.xlu0 %v304, 28
      %v1483 = vpop.permute.xlu0 %1482
      %1484 = vrot.lane.b32.xlu0 %v305, 28
      %v1485 = vpop.permute.xlu0 %1484
      %1486 = vrot.lane.b32.xlu0 %v306, 28
      %v1487 = vpop.permute.xlu0 %1486
      %1488 = vrot.lane.b32.xlu0 %v307, 28
      %v1489 = vpop.permute.xlu0 %1488
      %1490 = vrot.lane.b32.xlu0 %v308, 28
      %v1491 = vpop.permute.xlu0 %1490
      %1492 = vrot.lane.b32.xlu0 %v309, 28
      %v1493 = vpop.permute.xlu0 %1492
      %1494 = vrot.lane.b32.xlu0 %v310, 28
      %v1495 = vpop.permute.xlu0 %1494
      %1496 = vrot.lane.b32.xlu0 %v311, 28
      %v1497 = vpop.permute.xlu0 %1496
      %1498 = vrot.lane.b32.xlu0 %v312, 28
      %v1499 = vpop.permute.xlu0 %1498
      %1500 = vrot.lane.b32.xlu0 %v313, 28
      %v1501 = vpop.permute.xlu0 %1500
      %1502 = vrot.lane.b32.xlu0 %v314, 28
      %v1503 = vpop.permute.xlu0 %1502
      %1504 = vrot.lane.b32.xlu0 %v315, 28
      %v1505 = vpop.permute.xlu0 %1504
      %1506 = vrot.lane.b32.xlu0 %v316, 28
      %v1507 = vpop.permute.xlu0 %1506
      %1508 = vrot.lane.b32.xlu0 %v317, 28
      %v1509 = vpop.permute.xlu0 %1508
      %1510 = vrot.lane.b32.xlu0 %v318, 28
      %v1511 = vpop.permute.xlu0 %1510
      %1512 = vrot.lane.b32.xlu0 %v319, 28
      %v1513 = vpop.permute.xlu0 %1512
      %1514 = vrot.lane.b32.xlu0 %v320, 28
      %v1515 = vpop.permute.xlu0 %1514
      %1516 = vrot.lane.b32.xlu0 %v321, 28
      %v1517 = vpop.permute.xlu0 %1516
      %1518 = vrot.lane.b32.xlu0 %v322, 28
      %v1519 = vpop.permute.xlu0 %1518
      %1520 = vrot.lane.b32.xlu0 %v323, 28
      %v1521 = vpop.permute.xlu0 %1520
      %1522 = vrot.lane.b32.xlu0 %v324, 28
      %v1523 = vpop.permute.xlu0 %1522
      %1524 = vrot.lane.b32.xlu0 %v325, 28
      %v1525 = vpop.permute.xlu0 %1524
      %1526 = vrot.lane.b32.xlu0 %v326, 28
      %v1527 = vpop.permute.xlu0 %1526
      %1528 = vrot.lane.b32.xlu0 %v327, 28
      %v1529 = vpop.permute.xlu0 %1528
      %1530 = vrot.lane.b32.xlu0 %v328, 28
      %v1531 = vpop.permute.xlu0 %1530
      %1532 = vrot.lane.b32.xlu0 %v329, 28
      %v1533 = vpop.permute.xlu0 %1532
      %1534 = vrot.lane.b32.xlu0 %v330, 28
      %v1535 = vpop.permute.xlu0 %1534
      %1536 = vrot.lane.b32.xlu0 %v331, 28
      %v1537 = vpop.permute.xlu0 %1536
      %1538 = vrot.lane.b32.xlu0 %v332, 28
      %v1539 = vpop.permute.xlu0 %1538
      %1540 = vrot.lane.b32.xlu0 %v333, 28
      %v1541 = vpop.permute.xlu0 %1540
      %1542 = vrot.lane.b32.xlu0 %v334, 28
      %v1543 = vpop.permute.xlu0 %1542
      %1544 = vrot.lane.b32.xlu0 %v335, 28
      %v1545 = vpop.permute.xlu0 %1544
      %1546 = vrot.lane.b32.xlu0 %v336, 28
      %v1547 = vpop.permute.xlu0 %1546
      %1548 = vrot.lane.b32.xlu0 %v337, 28
      %v1549 = vpop.permute.xlu0 %1548
      %1550 = vrot.lane.b32.xlu0 %v338, 28
      %v1551 = vpop.permute.xlu0 %1550
      %1552 = vrot.lane.b32.xlu0 %v339, 28
      %v1553 = vpop.permute.xlu0 %1552
      %1554 = vrot.lane.b32.xlu0 %v340, 28
      %v1555 = vpop.permute.xlu0 %1554
      %1556 = vrot.lane.b32.xlu0 %v341, 28
      %v1557 = vpop.permute.xlu0 %1556
      %1558 = vrot.lane.b32.xlu0 %v342, 28
      %v1559 = vpop.permute.xlu0 %1558
      %1560 = vrot.lane.b32.xlu0 %v343, 28
      %v1561 = vpop.permute.xlu0 %1560
      %1562 = vrot.lane.b32.xlu0 %v344, 28
      %v1563 = vpop.permute.xlu0 %1562
      %1564 = vrot.lane.b32.xlu0 %v345, 28
      %v1565 = vpop.permute.xlu0 %1564
      %vm1614 = vcmask 261345
      %1615 = vst.msk [vmem:[#allocation3 - $0x1] sm:$0xfe] %vm1614, %v1471
      %vm1616 = vcmask 261344
      %1617 = vst.msk [vmem:[#allocation3 + $0x7] sm:$0xff] %vm1616, %v1473
      %vm1618 = vcmask 254176
      %1619 = vst.msk [vmem:[#allocation3 + $0xf] sm:$0x1] %vm1618, %v1475
      %1620 = vst.msk [vmem:[#allocation3 + $0xf] sm:$0xfe] %vm1614, %v1477
      %1621 = vst.msk [vmem:[#allocation3 + $0x17] sm:$0xff] %vm1616, %v1479
      %1622 = vst.msk [vmem:[#allocation3 + $0x1f] sm:$0x1] %vm1618, %v1481
      %1623 = vst.msk [vmem:[#allocation3 + $0x1f] sm:$0xfe] %vm1614, %v1483
      %1624 = vst.msk [vmem:[#allocation3 + $0x27] sm:$0xff] %vm1616, %v1485
      %1625 = vst.msk [vmem:[#allocation3 + $0x2f] sm:$0x1] %vm1618, %v1487
      %1626 = vst.msk [vmem:[#allocation3 + $0x2f] sm:$0xfe] %vm1614, %v1489
      %1627 = vst.msk [vmem:[#allocation3 + $0x37] sm:$0xff] %vm1616, %v1491
      %1628 = vst.msk [vmem:[#allocation3 + $0x3f] sm:$0x1] %vm1618, %v1493
      %1629 = vst.msk [vmem:[#allocation3 + $0x3f] sm:$0xfe] %vm1614, %v1495
      %1630 = vst.msk [vmem:[#allocation3 + $0x47] sm:$0xff] %vm1616, %v1497
      %1631 = vst.msk [vmem:[#allocation3 + $0x4f] sm:$0x1] %vm1618, %v1499
      %1632 = vst.msk [vmem:[#allocation3 + $0x4f] sm:$0xfe] %vm1614, %v1501
      %1633 = vst.msk [vmem:[#allocation3 + $0x57] sm:$0xff] %vm1616, %v1503
      %1634 = vst.msk [vmem:[#allocation3 + $0x5f] sm:$0x1] %vm1618, %v1505
      %1635 = vst.msk [vmem:[#allocation3 + $0x5f] sm:$0xfe] %vm1614, %v1507
      %1636 = vst.msk [vmem:[#allocation3 + $0x67] sm:$0xff] %vm1616, %v1509
      %1637 = vst.msk [vmem:[#allocation3 + $0x6f] sm:$0x1] %vm1618, %v1511
      %1638 = vst.msk [vmem:[#allocation3 + $0x6f] sm:$0xfe] %vm1614, %v1513
      %1639 = vst.msk [vmem:[#allocation3 + $0x77] sm:$0xff] %vm1616, %v1515
      %1640 = vst.msk [vmem:[#allocation3 + $0x7f] sm:$0x1] %vm1618, %v1517
      %1641 = vst.msk [vmem:[#allocation3 + $0x7f] sm:$0xfe] %vm1614, %v1519
      %1642 = vst.msk [vmem:[#allocation3 + $0x87] sm:$0xff] %vm1616, %v1521
      %1643 = vst.msk [vmem:[#allocation3 + $0x8f] sm:$0x1] %vm1618, %v1523
      %1644 = vst.msk [vmem:[#allocation3 + $0x8f] sm:$0xfe] %vm1614, %v1525
      %1645 = vst.msk [vmem:[#allocation3 + $0x97] sm:$0xff] %vm1616, %v1527
      %1646 = vst.msk [vmem:[#allocation3 + $0x9f] sm:$0x1] %vm1618, %v1529
      %1647 = vst.msk [vmem:[#allocation3 + $0x9f] sm:$0xfe] %vm1614, %v1531
      %1648 = vst.msk [vmem:[#allocation3 + $0xa7] sm:$0xff] %vm1616, %v1533
      %1649 = vst.msk [vmem:[#allocation3 + $0xaf] sm:$0x1] %vm1618, %v1535
      %1650 = vst.msk [vmem:[#allocation3 + $0xaf] sm:$0xfe] %vm1614, %v1537
      %1651 = vst.msk [vmem:[#allocation3 + $0xb7] sm:$0xff] %vm1616, %v1539
      %1652 = vst.msk [vmem:[#allocation3 + $0xbf] sm:$0x1] %vm1618, %v1541
      %1653 = vst.msk [vmem:[#allocation3 + $0xbf] sm:$0xfe] %vm1614, %v1543
      %1654 = vst.msk [vmem:[#allocation3 + $0xc7] sm:$0xff] %vm1616, %v1545
      %1655 = vst.msk [vmem:[#allocation3 + $0xcf] sm:$0x1] %vm1618, %v1547
      %1656 = vst.msk [vmem:[#allocation3 + $0xcf] sm:$0xfe] %vm1614, %v1549
      %1657 = vst.msk [vmem:[#allocation3 + $0xd7] sm:$0xff] %vm1616, %v1551
      %1658 = vst.msk [vmem:[#allocation3 + $0xdf] sm:$0x1] %vm1618, %v1553
      %1659 = vst.msk [vmem:[#allocation3 + $0xdf] sm:$0xfe] %vm1614, %v1555
      %1660 = vst.msk [vmem:[#allocation3 + $0xe7] sm:$0xff] %vm1616, %v1557
      %1661 = vst.msk [vmem:[#allocation3 + $0xef] sm:$0x1] %vm1618, %v1559
      %1662 = vst.msk [vmem:[#allocation3 + $0xef] sm:$0xfe] %vm1614, %v1561
      %1663 = vst.msk [vmem:[#allocation3 + $0xf7] sm:$0xff] %vm1616, %v1563
      %1664 = vst.msk [vmem:[#allocation3 + $0xff] sm:$0x1] %vm1618, %v1565
      %1665 = vrot.lane.b32.xlu0 %v298, 32
      %v1666 = vpop.permute.xlu0 %1665
      %1667 = vrot.lane.b32.xlu0 %v299, 32
      %v1668 = vpop.permute.xlu0 %1667
      %1669 = vrot.lane.b32.xlu0 %v300, 32
      %v1670 = vpop.permute.xlu0 %1669
      %1671 = vrot.lane.b32.xlu0 %v301, 32
      %v1672 = vpop.permute.xlu0 %1671
      %1673 = vrot.lane.b32.xlu0 %v302, 32
      %v1674 = vpop.permute.xlu0 %1673
      %1675 = vrot.lane.b32.xlu0 %v303, 32
      %v1676 = vpop.permute.xlu0 %1675
      %1677 = vrot.lane.b32.xlu0 %v304, 32
      %v1678 = vpop.permute.xlu0 %1677
      %1679 = vrot.lane.b32.xlu0 %v305, 32
      %v1680 = vpop.permute.xlu0 %1679
      %1681 = vrot.lane.b32.xlu0 %v306, 32
      %v1682 = vpop.permute.xlu0 %1681
      %1683 = vrot.lane.b32.xlu0 %v307, 32
      %v1684 = vpop.permute.xlu0 %1683
      %1685 = vrot.lane.b32.xlu0 %v308, 32
      %v1686 = vpop.permute.xlu0 %1685
      %1687 = vrot.lane.b32.xlu0 %v309, 32
      %v1688 = vpop.permute.xlu0 %1687
      %1689 = vrot.lane.b32.xlu0 %v310, 32
      %v1690 = vpop.permute.xlu0 %1689
      %1691 = vrot.lane.b32.xlu0 %v311, 32
      %v1692 = vpop.permute.xlu0 %1691
      %1693 = vrot.lane.b32.xlu0 %v312, 32
      %v1694 = vpop.permute.xlu0 %1693
      %1695 = vrot.lane.b32.xlu0 %v313, 32
      %v1696 = vpop.permute.xlu0 %1695
      %1697 = vrot.lane.b32.xlu0 %v314, 32
      %v1698 = vpop.permute.xlu0 %1697
      %1699 = vrot.lane.b32.xlu0 %v315, 32
      %v1700 = vpop.permute.xlu0 %1699
      %1701 = vrot.lane.b32.xlu0 %v316, 32
      %v1702 = vpop.permute.xlu0 %1701
      %1703 = vrot.lane.b32.xlu0 %v317, 32
      %v1704 = vpop.permute.xlu0 %1703
      %1705 = vrot.lane.b32.xlu0 %v318, 32
      %v1706 = vpop.permute.xlu0 %1705
      %1707 = vrot.lane.b32.xlu0 %v319, 32
      %v1708 = vpop.permute.xlu0 %1707
      %1709 = vrot.lane.b32.xlu0 %v320, 32
      %v1710 = vpop.permute.xlu0 %1709
      %1711 = vrot.lane.b32.xlu0 %v321, 32
      %v1712 = vpop.permute.xlu0 %1711
      %1713 = vrot.lane.b32.xlu0 %v322, 32
      %v1714 = vpop.permute.xlu0 %1713
      %1715 = vrot.lane.b32.xlu0 %v323, 32
      %v1716 = vpop.permute.xlu0 %1715
      %1717 = vrot.lane.b32.xlu0 %v324, 32
      %v1718 = vpop.permute.xlu0 %1717
      %1719 = vrot.lane.b32.xlu0 %v325, 32
      %v1720 = vpop.permute.xlu0 %1719
      %1721 = vrot.lane.b32.xlu0 %v326, 32
      %v1722 = vpop.permute.xlu0 %1721
      %1723 = vrot.lane.b32.xlu0 %v327, 32
      %v1724 = vpop.permute.xlu0 %1723
      %1725 = vrot.lane.b32.xlu0 %v328, 32
      %v1726 = vpop.permute.xlu0 %1725
      %1727 = vrot.lane.b32.xlu0 %v329, 32
      %v1728 = vpop.permute.xlu0 %1727
      %1729 = vrot.lane.b32.xlu0 %v330, 32
      %v1730 = vpop.permute.xlu0 %1729
      %1731 = vrot.lane.b32.xlu0 %v331, 32
      %v1732 = vpop.permute.xlu0 %1731
      %1733 = vrot.lane.b32.xlu0 %v332, 32
      %v1734 = vpop.permute.xlu0 %1733
      %1735 = vrot.lane.b32.xlu0 %v333, 32
      %v1736 = vpop.permute.xlu0 %1735
      %1737 = vrot.lane.b32.xlu0 %v334, 32
      %v1738 = vpop.permute.xlu0 %1737
      %1739 = vrot.lane.b32.xlu0 %v335, 32
      %v1740 = vpop.permute.xlu0 %1739
      %1741 = vrot.lane.b32.xlu0 %v336, 32
      %v1742 = vpop.permute.xlu0 %1741
      %1743 = vrot.lane.b32.xlu0 %v337, 32
      %v1744 = vpop.permute.xlu0 %1743
      %1745 = vrot.lane.b32.xlu0 %v338, 32
      %v1746 = vpop.permute.xlu0 %1745
      %1747 = vrot.lane.b32.xlu0 %v339, 32
      %v1748 = vpop.permute.xlu0 %1747
      %1749 = vrot.lane.b32.xlu0 %v340, 32
      %v1750 = vpop.permute.xlu0 %1749
      %1751 = vrot.lane.b32.xlu0 %v341, 32
      %v1752 = vpop.permute.xlu0 %1751
      %1753 = vrot.lane.b32.xlu0 %v342, 32
      %v1754 = vpop.permute.xlu0 %1753
      %1755 = vrot.lane.b32.xlu0 %v343, 32
      %v1756 = vpop.permute.xlu0 %1755
      %1757 = vrot.lane.b32.xlu0 %v344, 32
      %v1758 = vpop.permute.xlu0 %1757
      %1759 = vrot.lane.b32.xlu0 %v345, 32
      %v1760 = vpop.permute.xlu0 %1759
      %vm1809 = vcmask 294146
      %1810 = vst.msk [vmem:[#allocation3 - $0x2] sm:$0xfc] %vm1809, %v1666
      %vm1811 = vcmask 294144
      %1812 = vst.msk [vmem:[#allocation3 + $0x6] sm:$0xff] %vm1811, %v1668
      %vm1813 = vcmask 288000
      %1814 = vst.msk [vmem:[#allocation3 + $0xe] sm:$0x3] %vm1813, %v1670
      %1815 = vst.msk [vmem:[#allocation3 + $0xe] sm:$0xfc] %vm1809, %v1672
      %1816 = vst.msk [vmem:[#allocation3 + $0x16] sm:$0xff] %vm1811, %v1674
      %1817 = vst.msk [vmem:[#allocation3 + $0x1e] sm:$0x3] %vm1813, %v1676
      %1818 = vst.msk [vmem:[#allocation3 + $0x1e] sm:$0xfc] %vm1809, %v1678
      %1819 = vst.msk [vmem:[#allocation3 + $0x26] sm:$0xff] %vm1811, %v1680
      %1820 = vst.msk [vmem:[#allocation3 + $0x2e] sm:$0x3] %vm1813, %v1682
      %1821 = vst.msk [vmem:[#allocation3 + $0x2e] sm:$0xfc] %vm1809, %v1684
      %1822 = vst.msk [vmem:[#allocation3 + $0x36] sm:$0xff] %vm1811, %v1686
      %1823 = vst.msk [vmem:[#allocation3 + $0x3e] sm:$0x3] %vm1813, %v1688
      %1824 = vst.msk [vmem:[#allocation3 + $0x3e] sm:$0xfc] %vm1809, %v1690
      %1825 = vst.msk [vmem:[#allocation3 + $0x46] sm:$0xff] %vm1811, %v1692
      %1826 = vst.msk [vmem:[#allocation3 + $0x4e] sm:$0x3] %vm1813, %v1694
      %1827 = vst.msk [vmem:[#allocation3 + $0x4e] sm:$0xfc] %vm1809, %v1696
      %1828 = vst.msk [vmem:[#allocation3 + $0x56] sm:$0xff] %vm1811, %v1698
      %1829 = vst.msk [vmem:[#allocation3 + $0x5e] sm:$0x3] %vm1813, %v1700
      %1830 = vst.msk [vmem:[#allocation3 + $0x5e] sm:$0xfc] %vm1809, %v1702
      %1831 = vst.msk [vmem:[#allocation3 + $0x66] sm:$0xff] %vm1811, %v1704
      %1832 = vst.msk [vmem:[#allocation3 + $0x6e] sm:$0x3] %vm1813, %v1706
      %1833 = vst.msk [vmem:[#allocation3 + $0x6e] sm:$0xfc] %vm1809, %v1708
      %1834 = vst.msk [vmem:[#allocation3 + $0x76] sm:$0xff] %vm1811, %v1710
      %1835 = vst.msk [vmem:[#allocation3 + $0x7e] sm:$0x3] %vm1813, %v1712
      %1836 = vst.msk [vmem:[#allocation3 + $0x7e] sm:$0xfc] %vm1809, %v1714
      %1837 = vst.msk [vmem:[#allocation3 + $0x86] sm:$0xff] %vm1811, %v1716
      %1838 = vst.msk [vmem:[#allocation3 + $0x8e] sm:$0x3] %vm1813, %v1718
      %1839 = vst.msk [vmem:[#allocation3 + $0x8e] sm:$0xfc] %vm1809, %v1720
      %1840 = vst.msk [vmem:[#allocation3 + $0x96] sm:$0xff] %vm1811, %v1722
      %1841 = vst.msk [vmem:[#allocation3 + $0x9e] sm:$0x3] %vm1813, %v1724
      %1842 = vst.msk [vmem:[#allocation3 + $0x9e] sm:$0xfc] %vm1809, %v1726
      %1843 = vst.msk [vmem:[#allocation3 + $0xa6] sm:$0xff] %vm1811, %v1728
      %1844 = vst.msk [vmem:[#allocation3 + $0xae] sm:$0x3] %vm1813, %v1730
      %1845 = vst.msk [vmem:[#allocation3 + $0xae] sm:$0xfc] %vm1809, %v1732
      %1846 = vst.msk [vmem:[#allocation3 + $0xb6] sm:$0xff] %vm1811, %v1734
      %1847 = vst.msk [vmem:[#allocation3 + $0xbe] sm:$0x3] %vm1813, %v1736
      %1848 = vst.msk [vmem:[#allocation3 + $0xbe] sm:$0xfc] %vm1809, %v1738
      %1849 = vst.msk [vmem:[#allocation3 + $0xc6] sm:$0xff] %vm1811, %v1740
      %1850 = vst.msk [vmem:[#allocation3 + $0xce] sm:$0x3] %vm1813, %v1742
      %1851 = vst.msk [vmem:[#allocation3 + $0xce] sm:$0xfc] %vm1809, %v1744
      %1852 = vst.msk [vmem:[#allocation3 + $0xd6] sm:$0xff] %vm1811, %v1746
      %1853 = vst.msk [vmem:[#allocation3 + $0xde] sm:$0x3] %vm1813, %v1748
      %1854 = vst.msk [vmem:[#allocation3 + $0xde] sm:$0xfc] %vm1809, %v1750
      %1855 = vst.msk [vmem:[#allocation3 + $0xe6] sm:$0xff] %vm1811, %v1752
      %1856 = vst.msk [vmem:[#allocation3 + $0xee] sm:$0x3] %vm1813, %v1754
      %1857 = vst.msk [vmem:[#allocation3 + $0xee] sm:$0xfc] %vm1809, %v1756
      %1858 = vst.msk [vmem:[#allocation3 + $0xf6] sm:$0xff] %vm1811, %v1758
      %1859 = vst.msk [vmem:[#allocation3 + $0xfe] sm:$0x3] %vm1813, %v1760
      %v1860 = vld [vmem:[#allocation3] sm:$0xff]
      %v1861 = vld [vmem:[#allocation3 + $0x8] sm:$0xff]
      %v1862 = vld [vmem:[#allocation3 + $0x10] sm:$0xff]
      %v1863 = vld [vmem:[#allocation3 + $0x18] sm:$0xff]
      %v1864 = vld [vmem:[#allocation3 + $0x20] sm:$0xff]
      %v1865 = vld [vmem:[#allocation3 + $0x28] sm:$0xff]
      %v1866 = vld [vmem:[#allocation3 + $0x30] sm:$0xff]
      %v1867 = vld [vmem:[#allocation3 + $0x38] sm:$0xff]
      %v1868 = vld [vmem:[#allocation3 + $0x40] sm:$0xff]
      %v1869 = vld [vmem:[#allocation3 + $0x48] sm:$0xff]
      %v1870 = vld [vmem:[#allocation3 + $0x50] sm:$0xff]
      %v1871 = vld [vmem:[#allocation3 + $0x58] sm:$0xff]
      %v1872 = vld [vmem:[#allocation3 + $0x60] sm:$0xff]
      %v1873 = vld [vmem:[#allocation3 + $0x68] sm:$0xff]
      %v1874 = vld [vmem:[#allocation3 + $0x70] sm:$0xff]
      %v1875 = vld [vmem:[#allocation3 + $0x78] sm:$0xff]
      %v1876 = vld [vmem:[#allocation3 + $0x80] sm:$0xff]
      %v1877 = vld [vmem:[#allocation3 + $0x88] sm:$0xff]
      %v1878 = vld [vmem:[#allocation3 + $0x90] sm:$0xff]
      %v1879 = vld [vmem:[#allocation3 + $0x98] sm:$0xff]
      %v1880 = vld [vmem:[#allocation3 + $0xa0] sm:$0xff]
      %v1881 = vld [vmem:[#allocation3 + $0xa8] sm:$0xff]
      %v1882 = vld [vmem:[#allocation3 + $0xb0] sm:$0xff]
      %v1883 = vld [vmem:[#allocation3 + $0xb8] sm:$0xff]
      %v1884 = vld [vmem:[#allocation3 + $0xc0] sm:$0xff]
      %v1885 = vld [vmem:[#allocation3 + $0xc8] sm:$0xff]
      %v1886 = vld [vmem:[#allocation3 + $0xd0] sm:$0xff]
      %v1887 = vld [vmem:[#allocation3 + $0xd8] sm:$0xff]
      %v1888 = vld [vmem:[#allocation3 + $0xe0] sm:$0xff]
      %v1889 = vld [vmem:[#allocation3 + $0xe8] sm:$0xff]
      %v1890 = vld [vmem:[#allocation3 + $0xf0] sm:$0xff]
      %v1891 = vld [vmem:[#allocation3 + $0xf8] sm:$0xff]
      %v1892 = vld [vmem:[%s1] sm:$0xff]
      %v1893 = vld [vmem:[%s1 + $0x8] sm:$0xff]
      %v1894 = vld [vmem:[%s1 + $0x10] sm:$0xff]
      %v1895 = vld [vmem:[%s1 + $0x18] sm:$0xff]
      %v1896 = vld [vmem:[%s1 + $0x20] sm:$0xf]
      %vm1897 = vcmask 293888
      %v1899 = vsel %vm1897, %v1860, 0
      %v1902 = vsel %vm1897, %v1861, 0
      %v1905 = vsel %vm1897, %v1862, 0
      %v1908 = vsel %vm1897, %v1863, 0
      %v1911 = vsel %vm1897, %v1864, 0
      %v1914 = vsel %vm1897, %v1865, 0
      %v1917 = vsel %vm1897, %v1866, 0
      %v1920 = vsel %vm1897, %v1867, 0
      %v1923 = vsel %vm1897, %v1868, 0
      %v1926 = vsel %vm1897, %v1869, 0
      %v1929 = vsel %vm1897, %v1870, 0
      %v1932 = vsel %vm1897, %v1871, 0
      %v1935 = vsel %vm1897, %v1872, 0
      %v1938 = vsel %vm1897, %v1873, 0
      %v1941 = vsel %vm1897, %v1874, 0
      %v1944 = vsel %vm1897, %v1875, 0
      %v1947 = vsel %vm1897, %v1876, 0
      %v1950 = vsel %vm1897, %v1877, 0
      %v1953 = vsel %vm1897, %v1878, 0
      %v1956 = vsel %vm1897, %v1879, 0
      %v1959 = vsel %vm1897, %v1880, 0
      %v1962 = vsel %vm1897, %v1881, 0
      %v1965 = vsel %vm1897, %v1882, 0
      %v1968 = vsel %vm1897, %v1883, 0
      %v1971 = vsel %vm1897, %v1884, 0
      %v1974 = vsel %vm1897, %v1885, 0
      %v1977 = vsel %vm1897, %v1886, 0
      %v1980 = vsel %vm1897, %v1887, 0
      %v1983 = vsel %vm1897, %v1888, 0
      %v1986 = vsel %vm1897, %v1889, 0
      %v1989 = vsel %vm1897, %v1890, 0
      %v1992 = vsel %vm1897, %v1891, 0
      %vm1994 = vcmask 1043456
      %v1996 = vsel %vm1994, %v1896, 0
      %1998 = vmatprep.subr.mxu0 0.0
      %1999 = vmatpush1.msra.mxu0 %v1892
      %2000 = vmatprep.subr.mxu0 0.0
      %2001 = vmatpush1.msra.mxu0 %v1893
      %2002 = vmatprep.subr.mxu0 0.0
      %2003 = vmatpush1.msra.mxu0 %v1894
      %2004 = vmatprep.subr.mxu0 0.0
      %2005 = vmatpush1.msra.mxu0 %v1895
      %2006 = vmatprep.subr.mxu0 0.0
      %2007 = vmatpush1.msra.mxu0 %v1996
      %2008 = vmatprep.subr.mxu0 0.0
      %2009 = vmatpush1.msra.mxu0 0.0
      %2010 = vmatprep.subr.mxu0 0.0
      %2011 = vmatpush1.msra.mxu0 0.0
      %2012 = vmatprep.subr.mxu0 0.0
      %2013 = vmatpush1.msra.mxu0 0.0
      %2014 = vmatprep.subr.mxu0 0.0
      %2015 = vmatpush1.msra.mxu0 0.0
      %2016 = vmatprep.subr.mxu0 0.0
      %2017 = vmatpush1.msra.mxu0 0.0
      %2018 = vmatprep.subr.mxu0 0.0
      %2019 = vmatpush1.msra.mxu0 0.0
      %2020 = vmatprep.subr.mxu0 0.0
      %2021 = vmatpush1.msra.mxu0 0.0
      %2022 = vmatprep.subr.mxu0 0.0
      %2023 = vmatpush1.msra.mxu0 0.0
      %2024 = vmatprep.subr.mxu0 0.0
      %2025 = vmatpush1.msra.mxu0 0.0
      %2026 = vmatprep.subr.mxu0 0.0
      %2027 = vmatpush1.msra.mxu0 0.0
      %2028 = vmatprep.subr.mxu0 0.0
      %2029 = vmatpush1.msra.mxu0 0.0
      %2030 = vmatprep.subr.mxu0 0.0
      %2031 = vmatpush1.msra.mxu0 0.0
      %2032 = vmatprep.subr.mxu0 0.0
      %2033 = vmatpush1.msra.mxu0 0.0
      %2034 = vmatprep.subr.mxu0 0.0
      %2035 = vmatpush1.msra.mxu0 0.0
      %2036 = vmatprep.subr.mxu0 0.0
      %2037 = vmatpush1.msra.mxu0 0.0
      %2038 = vmatprep.subr.mxu0 0.0
      %2039 = vmatpush1.msra.mxu0 0.0
      %2040 = vmatprep.subr.mxu0 0.0
      %2041 = vmatpush1.msra.mxu0 0.0
      %2042 = vmatprep.subr.mxu0 0.0
      %2043 = vmatpush1.msra.mxu0 0.0
      %2044 = vmatprep.subr.mxu0 0.0
      %2045 = vmatpush1.msra.mxu0 0.0
      %2046 = vmatprep.subr.mxu0 0.0
      %2047 = vmatpush1.msra.mxu0 0.0
      %2048 = vmatprep.subr.mxu0 0.0
      %2049 = vmatpush1.msra.mxu0 0.0
      %2050 = vmatprep.subr.mxu0 0.0
      %2051 = vmatpush1.msra.mxu0 0.0
      %2052 = vmatprep.subr.mxu0 0.0
      %2053 = vmatpush1.msra.mxu0 0.0
      %2054 = vmatprep.subr.mxu0 0.0
      %2055 = vmatpush1.msra.mxu0 0.0
      %2056 = vmatprep.subr.mxu0 0.0
      %2057 = vmatpush1.msra.mxu0 0.0
      %2058 = vmatprep.subr.mxu0 0.0
      %2059 = vmatpush1.msra.mxu0 0.0
      %2060 = vmatprep.subr.mxu0 0.0
      %2061 = vmatpush1.msra.mxu0 0.0
      %2062 = vmatprep.mubr.f32.mxu0 0.0
      %2063 = vmatmul.mubr.f32.gmra.mrb[0].mxu0 %v1899
      %v2064 = vpop.f32.mrb[0].mxu0
      %v2065 = vadd.f32 0.0, %v2064
      %v2066 = vpop.f32.mrb[0].mxu0
      %2067 = vmatprep.mubr.f32.mxu0 0.0
      %2068 = vmatmul.mubr.f32.gmra.mrb[0].mxu0 %v1902
      %v2069 = vpop.f32.mrb[0].mxu0
      %v2070 = vadd.f32 0.0, %v2069
      %v2071 = vpop.f32.mrb[0].mxu0
      %2072 = vmatprep.mubr.f32.mxu0 0.0
      %2073 = vmatmul.mubr.f32.gmra.mrb[0].mxu0 %v1905
      %v2074 = vpop.f32.mrb[0].mxu0
      %v2075 = vadd.f32 0.0, %v2074
      %v2076 = vpop.f32.mrb[0].mxu0
      %2077 = vmatprep.mubr.f32.mxu0 0.0
      %2078 = vmatmul.mubr.f32.gmra.mrb[0].mxu0 %v1908
      %v2079 = vpop.f32.mrb[0].mxu0
      %v2080 = vadd.f32 0.0, %v2079
      %v2081 = vpop.f32.mrb[0].mxu0
      %2082 = vmatprep.mubr.f32.mxu0 0.0
      %2083 = vmatmul.mubr.f32.gmra.mrb[0].mxu0 %v1911
      %v2084 = vpop.f32.mrb[0].mxu0
      %v2085 = vadd.f32 0.0, %v2084
      %v2086 = vpop.f32.mrb[0].mxu0
      %2087 = vmatprep.mubr.f32.mxu0 0.0
      %2088 = vmatmul.mubr.f32.gmra.mrb[0].mxu0 %v1914
      %v2089 = vpop.f32.mrb[0].mxu0
      %v2090 = vadd.f32 0.0, %v2089
      %v2091 = vpop.f32.mrb[0].mxu0
      %2092 = vmatprep.mubr.f32.mxu0 0.0
      %2093 = vmatmul.mubr.f32.gmra.mrb[0].mxu0 %v1917
      %v2094 = vpop.f32.mrb[0].mxu0
      %v2095 = vadd.f32 0.0, %v2094
      %v2096 = vpop.f32.mrb[0].mxu0
      %2097 = vmatprep.mubr.f32.mxu0 0.0
      %2098 = vmatmul.mubr.f32.gmra.mrb[0].mxu0 %v1920
      %v2099 = vpop.f32.mrb[0].mxu0
      %v2100 = vadd.f32 0.0, %v2099
      %v2101 = vpop.f32.mrb[0].mxu0
      %2102 = vmatprep.mubr.f32.mxu0 0.0
      %2103 = vmatmul.mubr.f32.gmra.mrb[0].mxu0 %v1923
      %v2104 = vpop.f32.mrb[0].mxu0
      %v2105 = vadd.f32 0.0, %v2104
      %v2106 = vpop.f32.mrb[0].mxu0
      %2107 = vmatprep.mubr.f32.mxu0 0.0
      %2108 = vmatmul.mubr.f32.gmra.mrb[0].mxu0 %v1926
      %v2109 = vpop.f32.mrb[0].mxu0
      %v2110 = vadd.f32 0.0, %v2109
      %v2111 = vpop.f32.mrb[0].mxu0
      %2112 = vmatprep.mubr.f32.mxu0 0.0
      %2113 = vmatmul.mubr.f32.gmra.mrb[0].mxu0 %v1929
      %v2114 = vpop.f32.mrb[0].mxu0
      %v2115 = vadd.f32 0.0, %v2114
      %v2116 = vpop.f32.mrb[0].mxu0
      %2117 = vmatprep.mubr.f32.mxu0 0.0
      %2118 = vmatmul.mubr.f32.gmra.mrb[0].mxu0 %v1932
      %v2119 = vpop.f32.mrb[0].mxu0
      %v2120 = vadd.f32 0.0, %v2119
      %v2121 = vpop.f32.mrb[0].mxu0
      %2122 = vmatprep.mubr.f32.mxu0 0.0
      %2123 = vmatmul.mubr.f32.gmra.mrb[0].mxu0 %v1935
      %v2124 = vpop.f32.mrb[0].mxu0
      %v2125 = vadd.f32 0.0, %v2124
      %v2126 = vpop.f32.mrb[0].mxu0
      %2127 = vmatprep.mubr.f32.mxu0 0.0
      %2128 = vmatmul.mubr.f32.gmra.mrb[0].mxu0 %v1938
      %v2129 = vpop.f32.mrb[0].mxu0
      %v2130 = vadd.f32 0.0, %v2129
      %v2131 = vpop.f32.mrb[0].mxu0
      %2132 = vmatprep.mubr.f32.mxu0 0.0
      %2133 = vmatmul.mubr.f32.gmra.mrb[0].mxu0 %v1941
      %v2134 = vpop.f32.mrb[0].mxu0
      %v2135 = vadd.f32 0.0, %v2134
      %v2136 = vpop.f32.mrb[0].mxu0
      %2137 = vmatprep.mubr.f32.mxu0 0.0
      %2138 = vmatmul.mubr.f32.gmra.mrb[0].mxu0 %v1944
      %v2139 = vpop.f32.mrb[0].mxu0
      %v2140 = vadd.f32 0.0, %v2139
      %v2141 = vpop.f32.mrb[0].mxu0
      %2142 = vmatprep.mubr.f32.mxu0 0.0
      %2143 = vmatmul.mubr.f32.gmra.mrb[0].mxu0 %v1947
      %v2144 = vpop.f32.mrb[0].mxu0
      %v2145 = vadd.f32 0.0, %v2144
      %v2146 = vpop.f32.mrb[0].mxu0
      %2147 = vmatprep.mubr.f32.mxu0 0.0
      %2148 = vmatmul.mubr.f32.gmra.mrb[0].mxu0 %v1950
      %v2149 = vpop.f32.mrb[0].mxu0
      %v2150 = vadd.f32 0.0, %v2149
      %v2151 = vpop.f32.mrb[0].mxu0
      %2152 = vmatprep.mubr.f32.mxu0 0.0
      %2153 = vmatmul.mubr.f32.gmra.mrb[0].mxu0 %v1953
      %v2154 = vpop.f32.mrb[0].mxu0
      %v2155 = vadd.f32 0.0, %v2154
      %v2156 = vpop.f32.mrb[0].mxu0
      %2157 = vmatprep.mubr.f32.mxu0 0.0
      %2158 = vmatmul.mubr.f32.gmra.mrb[0].mxu0 %v1956
      %v2159 = vpop.f32.mrb[0].mxu0
      %v2160 = vadd.f32 0.0, %v2159
      %v2161 = vpop.f32.mrb[0].mxu0
      %2162 = vmatprep.mubr.f32.mxu0 0.0
      %2163 = vmatmul.mubr.f32.gmra.mrb[0].mxu0 %v1959
      %v2164 = vpop.f32.mrb[0].mxu0
      %v2165 = vadd.f32 0.0, %v2164
      %v2166 = vpop.f32.mrb[0].mxu0
      %2167 = vmatprep.mubr.f32.mxu0 0.0
      %2168 = vmatmul.mubr.f32.gmra.mrb[0].mxu0 %v1962
      %v2169 = vpop.f32.mrb[0].mxu0
      %v2170 = vadd.f32 0.0, %v2169
      %v2171 = vpop.f32.mrb[0].mxu0
      %2172 = vmatprep.mubr.f32.mxu0 0.0
      %2173 = vmatmul.mubr.f32.gmra.mrb[0].mxu0 %v1965
      %v2174 = vpop.f32.mrb[0].mxu0
      %v2175 = vadd.f32 0.0, %v2174
      %v2176 = vpop.f32.mrb[0].mxu0
      %2177 = vmatprep.mubr.f32.mxu0 0.0
      %2178 = vmatmul.mubr.f32.gmra.mrb[0].mxu0 %v1968
      %v2179 = vpop.f32.mrb[0].mxu0
      %v2180 = vadd.f32 0.0, %v2179
      %v2181 = vpop.f32.mrb[0].mxu0
      %2182 = vmatprep.mubr.f32.mxu0 0.0
      %2183 = vmatmul.mubr.f32.gmra.mrb[0].mxu0 %v1971
      %v2184 = vpop.f32.mrb[0].mxu0
      %v2185 = vadd.f32 0.0, %v2184
      %v2186 = vpop.f32.mrb[0].mxu0
      %2187 = vmatprep.mubr.f32.mxu0 0.0
      %2188 = vmatmul.mubr.f32.gmra.mrb[0].mxu0 %v1974
      %v2189 = vpop.f32.mrb[0].mxu0
      %v2190 = vadd.f32 0.0, %v2189
      %v2191 = vpop.f32.mrb[0].mxu0
      %2192 = vmatprep.mubr.f32.mxu0 0.0
      %2193 = vmatmul.mubr.f32.gmra.mrb[0].mxu0 %v1977
      %v2194 = vpop.f32.mrb[0].mxu0
      %v2195 = vadd.f32 0.0, %v2194
      %v2196 = vpop.f32.mrb[0].mxu0
      %2197 = vmatprep.mubr.f32.mxu0 0.0
      %2198 = vmatmul.mubr.f32.gmra.mrb[0].mxu0 %v1980
      %v2199 = vpop.f32.mrb[0].mxu0
      %v2200 = vadd.f32 0.0, %v2199
      %v2201 = vpop.f32.mrb[0].mxu0
      %2202 = vmatprep.mubr.f32.mxu0 0.0
      %2203 = vmatmul.mubr.f32.gmra.mrb[0].mxu0 %v1983
      %v2204 = vpop.f32.mrb[0].mxu0
      %v2205 = vadd.f32 0.0, %v2204
      %v2206 = vpop.f32.mrb[0].mxu0
      %2207 = vmatprep.mubr.f32.mxu0 0.0
      %2208 = vmatmul.mubr.f32.gmra.mrb[0].mxu0 %v1986
      %v2209 = vpop.f32.mrb[0].mxu0
      %v2210 = vadd.f32 0.0, %v2209
      %v2211 = vpop.f32.mrb[0].mxu0
      %2212 = vmatprep.mubr.f32.mxu0 0.0
      %2213 = vmatmul.mubr.f32.gmra.mrb[0].mxu0 %v1989
      %v2214 = vpop.f32.mrb[0].mxu0
      %v2215 = vadd.f32 0.0, %v2214
      %v2216 = vpop.f32.mrb[0].mxu0
      %2217 = vmatprep.mubr.f32.mxu0 0.0
      %2218 = vmatmul.mubr.f32.gmra.mrb[0].mxu0 %v1992
      %v2219 = vpop.f32.mrb[0].mxu0
      %v2220 = vadd.f32 0.0, %v2219
      %v2221 = vpop.f32.mrb[0].mxu0
      %2222 = vdwg.mxu0
      %v2223 = vld [vmem:[%s2] sm:$0x1]
      %v2225 = vlaneseq
      %v2226 = vshrl.u32 %v2225, 7
      %v2227 = vsub.s32 0, %v2226
      %v2228 = vrot.slane %v2223, %v2227
      %v2230 = vadd.f32 %v2065, %v2228
      %v2231 = vadd.f32 %v2070, %v2228
      %v2232 = vadd.f32 %v2075, %v2228
      %v2233 = vadd.f32 %v2080, %v2228
      %v2234 = vadd.f32 %v2085, %v2228
      %v2235 = vadd.f32 %v2090, %v2228
      %v2236 = vadd.f32 %v2095, %v2228
      %v2237 = vadd.f32 %v2100, %v2228
      %v2238 = vadd.f32 %v2105, %v2228
      %v2239 = vadd.f32 %v2110, %v2228
      %v2240 = vadd.f32 %v2115, %v2228
      %v2241 = vadd.f32 %v2120, %v2228
      %v2242 = vadd.f32 %v2125, %v2228
      %v2243 = vadd.f32 %v2130, %v2228
      %v2244 = vadd.f32 %v2135, %v2228
      %v2245 = vadd.f32 %v2140, %v2228
      %v2246 = vadd.f32 %v2145, %v2228
      %v2247 = vadd.f32 %v2150, %v2228
      %v2248 = vadd.f32 %v2155, %v2228
      %v2249 = vadd.f32 %v2160, %v2228
      %v2250 = vadd.f32 %v2165, %v2228
      %v2251 = vadd.f32 %v2170, %v2228
      %v2252 = vadd.f32 %v2175, %v2228
      %v2253 = vadd.f32 %v2180, %v2228
      %v2254 = vadd.f32 %v2185, %v2228
      %v2255 = vadd.f32 %v2190, %v2228
      %v2256 = vadd.f32 %v2195, %v2228
      %v2257 = vadd.f32 %v2200, %v2228
      %v2258 = vadd.f32 %v2205, %v2228
      %v2259 = vadd.f32 %v2210, %v2228
      %v2260 = vadd.f32 %v2215, %v2228
      %v2261 = vadd.f32 %v2220, %v2228
      %v2262 = vadd.f32 %v2230, %v171
      %v2263 = vadd.f32 %v2231, %v172
      %v2264 = vadd.f32 %v2232, %v173
      %v2265 = vadd.f32 %v2233, %v174
      %v2266 = vadd.f32 %v2234, %v175
      %v2267 = vadd.f32 %v2235, %v176
      %v2268 = vadd.f32 %v2236, %v177
      %v2269 = vadd.f32 %v2237, %v178
      %v2270 = vadd.f32 %v2238, %v179
      %v2271 = vadd.f32 %v2239, %v180
      %v2272 = vadd.f32 %v2240, %v181
      %v2273 = vadd.f32 %v2241, %v182
      %v2274 = vadd.f32 %v2242, %v183
      %v2275 = vadd.f32 %v2243, %v184
      %v2276 = vadd.f32 %v2244, %v185
      %v2277 = vadd.f32 %v2245, %v186
      %v2278 = vadd.f32 %v2246, %v187
      %v2279 = vadd.f32 %v2247, %v188
      %v2280 = vadd.f32 %v2248, %v189
      %v2281 = vadd.f32 %v2249, %v190
      %v2282 = vadd.f32 %v2250, %v191
      %v2283 = vadd.f32 %v2251, %v192
      %v2284 = vadd.f32 %v2252, %v193
      %v2285 = vadd.f32 %v2253, %v194
      %v2286 = vadd.f32 %v2254, %v195
      %v2287 = vadd.f32 %v2255, %v196
      %v2288 = vadd.f32 %v2256, %v197
      %v2289 = vadd.f32 %v2257, %v198
      %v2290 = vadd.f32 %v2258, %v199
      %v2291 = vadd.f32 %v2259, %v200
      %v2292 = vadd.f32 %v2260, %v201
      %v2293 = vadd.f32 %v2261, %v202
      %2294 = vst.msk [vmem:[%s170] sm:$0xff] %vm203, %v2262
      %2295 = vst.msk [vmem:[%s170 + $0x8] sm:$0xff] %vm203, %v2263
      %2296 = vst.msk [vmem:[%s170 + $0x10] sm:$0xff] %vm203, %v2264
      %2297 = vst.msk [vmem:[%s170 + $0x18] sm:$0xff] %vm203, %v2265
      %2298 = vst.msk [vmem:[%s170 + $0x20] sm:$0xff] %vm203, %v2266
      %2299 = vst.msk [vmem:[%s170 + $0x28] sm:$0xff] %vm203, %v2267
      %2300 = vst.msk [vmem:[%s170 + $0x30] sm:$0xff] %vm203, %v2268
      %2301 = vst.msk [vmem:[%s170 + $0x38] sm:$0xff] %vm203, %v2269
      %2302 = vst.msk [vmem:[%s170 + $0x40] sm:$0xff] %vm203, %v2270
      %2303 = vst.msk [vmem:[%s170 + $0x48] sm:$0xff] %vm203, %v2271
      %2304 = vst.msk [vmem:[%s170 + $0x50] sm:$0xff] %vm203, %v2272
      %2305 = vst.msk [vmem:[%s170 + $0x58] sm:$0xff] %vm203, %v2273
      %2306 = vst.msk [vmem:[%s170 + $0x60] sm:$0xff] %vm203, %v2274
      %2307 = vst.msk [vmem:[%s170 + $0x68] sm:$0xff] %vm203, %v2275
      %2308 = vst.msk [vmem:[%s170 + $0x70] sm:$0xff] %vm203, %v2276
      %2309 = vst.msk [vmem:[%s170 + $0x78] sm:$0xff] %vm203, %v2277
      %2310 = vst.msk [vmem:[%s170 + $0x80] sm:$0xff] %vm203, %v2278
      %2311 = vst.msk [vmem:[%s170 + $0x88] sm:$0xff] %vm203, %v2279
      %2312 = vst.msk [vmem:[%s170 + $0x90] sm:$0xff] %vm203, %v2280
      %2313 = vst.msk [vmem:[%s170 + $0x98] sm:$0xff] %vm203, %v2281
      %2314 = vst.msk [vmem:[%s170 + $0xa0] sm:$0xff] %vm203, %v2282
      %2315 = vst.msk [vmem:[%s170 + $0xa8] sm:$0xff] %vm203, %v2283
      %2316 = vst.msk [vmem:[%s170 + $0xb0] sm:$0xff] %vm203, %v2284
      %2317 = vst.msk [vmem:[%s170 + $0xb8] sm:$0xff] %vm203, %v2285
      %2318 = vst.msk [vmem:[%s170 + $0xc0] sm:$0xff] %vm203, %v2286
      %2319 = vst.msk [vmem:[%s170 + $0xc8] sm:$0xff] %vm203, %v2287
      %2320 = vst.msk [vmem:[%s170 + $0xd0] sm:$0xff] %vm203, %v2288
      %2321 = vst.msk [vmem:[%s170 + $0xd8] sm:$0xff] %vm203, %v2289
      %2322 = vst.msk [vmem:[%s170 + $0xe0] sm:$0xff] %vm203, %v2290
      %2323 = vst.msk [vmem:[%s170 + $0xe8] sm:$0xff] %vm203, %v2291
      %2324 = vst.msk [vmem:[%s170 + $0xf0] sm:$0xff] %vm203, %v2292
      %2325 = vst.msk [vmem:[%s170 + $0xf8] sm:$0xff] %vm203, %v2293
      %p2326 = scmp.lt.s32.totalorder %s14, 1
      %s2327 = scalar_select %p2326, %s14, 1
      %s2328 = smul.addr %s2327, 32
      %s2329 = smul.addr %s2328, 8
      %s2330 = scalar_lea.vmem %s3, %s2329
      // Predicated region
      $region33: #{tpu_custom_call.1} parent=31 // pred_check
        %p2331 = pneg %p100
      $region34: #{tpu_custom_call.1} parent=31 // pred_check_branch
        %2333 = sbr.rel (%p2331) target = $region36
      $region35: #{tpu_custom_call.1} parent=31 // pred_region
        _
      $region36: #{tpu_custom_call.1} parent=31 // pred_fallthru
        _
    $region32: #{tpu_custom_call.1} parent=5 // pred_fallthru
      _
    %p2334 = scmp.le.s32.totalorder 2, %s9
    // Predicated region
    $region37: #{tpu_custom_call.1} parent=5 // pred_check
      %p2335 = pneg %p2334
    $region38: #{tpu_custom_call.1} parent=5 // pred_check_branch
      %2337 = sbr.rel (%p2335) target = $region40
    $region39: #{tpu_custom_call.1} parent=5 // pred_region
      %s2338 = ssub.s32 %s9, 2
      // Predicated region
      $region41: #{tpu_custom_call.1} parent=39 // pred_check
        %p2339 = pneg %p106
      $region42: #{tpu_custom_call.1} parent=39 // pred_check_branch
        %2341 = sbr.rel (%p2339) target = $region44
      $region43: #{tpu_custom_call.1} parent=39 // pred_region
        %p2342 = scmp.lt.s32.totalorder %s15, 1
        %s2343 = scalar_select %p2342, %s15, 1
        %s2344 = smul.addr %s2343, 32
        %s2345 = smul.addr %s2344, 8
        %s2346 = scalar_lea.vmem %s3, %s2345
      $region44: #{tpu_custom_call.1} parent=39 // pred_fallthru
        _
    $region40: #{tpu_custom_call.1} parent=5 // pred_fallthru
      _
  $region6: #{tpu_custom_call.1} parent=0 // loop_footer
    %s13 = sadd.s32 1, %s9
  $region7: #{tpu_custom_call.1} parent=0 // loop_footer_branch
    %8 = sbr.rel target = $region3
  $region8: #{tpu_custom_call.1} parent=0 // loop_exit
    _

</llo_original>
